<compile_context>
chip_gen: v6e
topology: v6e:2x2x1
jax: 0.10.0
libtpu: 0.0.40
codegen_flags: <defaults>
</compile_context>

<pallas_src>
import functools

import jax
import jax.numpy as jnp
from jax import lax
from jax.experimental import pallas as pl
from jax.experimental.pallas import tpu as pltpu

# Architecture (fixed by the PyTorch module): 2 -> 8 -> 16 -> 32 -> 32 -> 1.
LAYER_DIMS = [(2, 8), (8, 16), (16, 32), (32, 32), (32, 1)]  # (in, out)

# Row offsets of each layer inside the packed weight / bias slabs.
_ROW_OFF = []
_r = 0
for _fin, _fout in LAYER_DIMS:
    _ROW_OFF.append(_r)
    _r += _fout
SLAB_ROWS = ((_r + 7) // 8) * 8          # 89 -> 96 (sublane-aligned)
SLAB_COLS = max(fin for fin, _ in LAYER_DIMS)  # 32

CHUNK = 512       # inner-loop lane chunk (multiple of 128, caps vreg pressure)
MAX_TILE = 4096   # max lanes per grid step (amortizes per-step overhead)


def _round_up(a, m):
    return -(-a // m) * m


def binary_mlp_kernel(x_ref, w_ref, b_ref, o_ref, *, chunk):
    # x_ref: (2, tile_n)   w_ref: (SLAB_ROWS, 32)   b_ref: (SLAB_ROWS, 1)
    # o_ref: (1, tile_n)
    # Load the (tiny) folded weights/biases once per grid step; they are
    # VMEM-resident across the whole grid (constant index_map).
    ws, bs = [], []
    for (fin, fout), r0 in zip(LAYER_DIMS, _ROW_OFF):
        ws.append(w_ref[r0:r0 + fout, 0:fin])
        bs.append(b_ref[r0:r0 + fout, :])

    n_chunks = x_ref.shape[1] // chunk  # static

    def chunk_body(j, carry):
        col = pl.multiple_of(j * chunk, 128)
        x = x_ref[:, pl.ds(col, chunk)]                      # (2, chunk)

        # Layer 0 (K = 2): two VPU FMAs beat a padded MXU matmul.
        t = jnp.tanh(ws[0][:, 0:1] * x[0:1, :]
                     + ws[0][:, 1:2] * x[1:2, :]
                     + bs[0])                                # (8, chunk)

        # Remaining layers: sigmoid affine is folded into W/b -> plain tanh.
        for w, b in zip(ws[1:], bs[1:]):
            t = jnp.tanh(
                jnp.dot(w, t, preferred_element_type=jnp.float32) + b)

        # Undo the folding only on the final output: sigmoid = 0.5*tanh + 0.5.
        o_ref[:, pl.ds(col, chunk)] = (0.5 * t + 0.5).astype(o_ref.dtype)
        return carry

    lax.fori_loop(0, n_chunks, chunk_body, 0, unroll=True)


def fold_params(params):
    """Fold the sigmoid affine into the weights (host-side, once, exact *2^-k)."""
    folded = []
    w0, b0 = params[0]
    folded.append((0.5 * w0, 0.5 * b0))
    for w, b in params[1:]:
        folded.append((0.25 * w, 0.5 * b + 0.25 * jnp.sum(w, axis=1, keepdims=True)))
    return folded


def pack_params(folded):
    """Pack all W / b into two sublane-aligned slabs (one DMA each)."""
    w_slab = jnp.zeros((SLAB_ROWS, SLAB_COLS), jnp.float32)
    b_slab = jnp.zeros((SLAB_ROWS, 1), jnp.float32)
    for (w, b), r0 in zip(folded, _ROW_OFF):
        out, fin = w.shape
        w_slab = w_slab.at[r0:r0 + out, :fin].set(w)
        b_slab = b_slab.at[r0:r0 + out, :].set(b)
    return w_slab, b_slab


def binary_forward(x, params, *, tile_n=None, chunk=CHUNK):
    """x: (N, 2) float32; params: list of (W, b) with W:(out, in), b:(out, 1)."""
    n = x.shape[0]
    if tile_n is None:
        # Big tiles amortize the per-grid-step cost, but keep >= 2 grid steps
        # whenever the batch allows it so v7x's two TensorCores both get work.
        tile_n = min(MAX_TILE, _round_up(max(1, (n + 1) // 2), chunk))
    assert tile_n % chunk == 0 and tile_n % 128 == 0, (tile_n, chunk)

    n_pad = _round_up(n, tile_n)

    # Transpose + zero-pad so batch occupies the lane axis.  (A producer that
    # can emit (2, N) feature-major directly would skip this extra HBM pass.)
    x_t = jnp.zeros((2, n_pad), jnp.float32).at[:, :n].set(x.T)

    w_slab, b_slab = pack_params(fold_params(params))

    const_map = lambda i: (0, 0)
    out_t = pl.pallas_call(
        functools.partial(binary_mlp_kernel, chunk=chunk),
        out_shape=jax.ShapeDtypeStruct((1, n_pad), jnp.float32),
        grid=(n_pad // tile_n,),
        in_specs=[
            pl.BlockSpec((2, tile_n), lambda i: (0, i)),
            pl.BlockSpec((SLAB_ROWS, SLAB_COLS), const_map),
            pl.BlockSpec((SLAB_ROWS, 1), const_map),
        ],
        out_specs=pl.BlockSpec((1, tile_n), lambda i: (0, i)),
        compiler_params=pltpu.CompilerParams(
            dimension_semantics=("parallel",),  # batch tiles split across TCs (v7x)
        ),
    )(x_t, w_slab, b_slab)

    return out_t.T[:n]  # (N, 1)


def init_params(key):
    """PyTorch-convention shapes: W (out, in), b (out, 1); U(-1/sqrt(in), 1/sqrt(in))."""
    params = []
    for fan_in, fan_out in LAYER_DIMS:
        key, kw, kb = jax.random.split(key, 3)
        bound = 1.0 / (fan_in ** 0.5)
        w = jax.random.uniform(kw, (fan_out, fan_in), jnp.float32, -bound, bound)
        b = jax.random.uniform(kb, (fan_out, 1), jnp.float32, -bound, bound)
        params.append((w, b))
    return params


def reference_forward(x, params):
    h = x
    for w, b in params:
        h = jax.nn.sigmoid(h @ w.T + b.T)
    return h


if __name__ == "__main__":
    key = jax.random.PRNGKey(0)
    key, kx = jax.random.split(key)

    # Batch of 2-feature inputs.  n = 2000 -> tile_n = 1024, n_pad = 2048:
    # exercises the padding path, a 2-step grid (v7x TC split) and a 2-chunk
    # inner loop per grid step.
    n = 2000
    x = jax.random.normal(kx, (n, 2), jnp.float32)
    params = init_params(key)

    out = jax.block_until_ready(binary_forward(x, params))

    ref = reference_forward(x, params)
    assert out.shape == (n, 1), out.shape
    assert jnp.allclose(out, ref, atol=1e-5, rtol=1e-5), float(
        jnp.max(jnp.abs(out - ref)))

    print("KERNEL_OK")
</pallas_src>

<mosaic_0001>
module attributes {stable_mosaic.version = 11 : i64} {
  func.func @binary_mlp_kernel(%arg0: i32, %arg1: memref<2x1024xf32, #tpu.memory_space<vmem>>, %arg2: memref<96x32xf32, #tpu.memory_space<vmem>>, %arg3: memref<96x1xf32, #tpu.memory_space<vmem>>, %arg4: memref<1x1024xf32, #tpu.memory_space<vmem>>) attributes {dimension_semantics = [#tpu.dimension_semantics<parallel>], iteration_bounds = array<i64: 2>, scalar_prefetch = 0 : i64, scratch_operands = 0 : i64, tpu.core_type = #tpu.core_type<tc>, window_params = [{transform_indices = @transform_0, window_bounds = array<i64: 2, 1024>}, {pipeline_mode = #tpu.pipeline_mode<synchronous>, transform_indices = @transform_1, window_bounds = array<i64: 96, 32>}, {pipeline_mode = #tpu.pipeline_mode<synchronous>, transform_indices = @transform_2, window_bounds = array<i64: 96, 1>}, {transform_indices = @transform_3, window_bounds = array<i64: 1, 1024>}]} {
    %c0 = arith.constant 0 : index
    %c0_0 = arith.constant 0 : index
    %0 = vector.load %arg2[%c0, %c0_0] : memref<96x32xf32, #tpu.memory_space<vmem>>, vector<8x2xf32>
    %c0_1 = arith.constant 0 : index
    %c0_2 = arith.constant 0 : index
    %1 = vector.load %arg3[%c0_1, %c0_2] : memref<96x1xf32, #tpu.memory_space<vmem>>, vector<8x1xf32>
    %c8 = arith.constant 8 : index
    %c0_3 = arith.constant 0 : index
    %2 = vector.load %arg2[%c8, %c0_3] : memref<96x32xf32, #tpu.memory_space<vmem>>, vector<16x8xf32>
    %c8_4 = arith.constant 8 : index
    %c0_5 = arith.constant 0 : index
    %3 = vector.load %arg3[%c8_4, %c0_5] : memref<96x1xf32, #tpu.memory_space<vmem>>, vector<16x1xf32>
    %c24 = arith.constant 24 : index
    %c0_6 = arith.constant 0 : index
    %4 = vector.load %arg2[%c24, %c0_6] : memref<96x32xf32, #tpu.memory_space<vmem>>, vector<32x16xf32>
    %c24_7 = arith.constant 24 : index
    %c0_8 = arith.constant 0 : index
    %5 = vector.load %arg3[%c24_7, %c0_8] : memref<96x1xf32, #tpu.memory_space<vmem>>, vector<32x1xf32>
    %c56 = arith.constant 56 : index
    %c0_9 = arith.constant 0 : index
    %6 = vector.load %arg2[%c56, %c0_9] : memref<96x32xf32, #tpu.memory_space<vmem>>, vector<32x32xf32>
    %c56_10 = arith.constant 56 : index
    %c0_11 = arith.constant 0 : index
    %7 = vector.load %arg3[%c56_10, %c0_11] : memref<96x1xf32, #tpu.memory_space<vmem>>, vector<32x1xf32>
    %c88 = arith.constant 88 : index
    %c0_12 = arith.constant 0 : index
    %8 = vector.load %arg2[%c88, %c0_12] : memref<96x32xf32, #tpu.memory_space<vmem>>, vector<1x32xf32>
    %c88_13 = arith.constant 88 : index
    %c0_14 = arith.constant 0 : index
    %9 = vector.load %arg3[%c88_13, %c0_14] : memref<96x1xf32, #tpu.memory_space<vmem>>, vector<1x1xf32>
    %c0_i32 = arith.constant 0 : i32
    %c512_i32 = arith.constant 512 : i32
    %10 = arith.muli %c0_i32, %c512_i32 : i32
    %11 = tpu.assume_multiple %10, 128 : i32
    %c0_15 = arith.constant 0 : index
    %12 = arith.index_cast %11 : i32 to index
    %13 = vector.load %arg1[%c0_15, %12] : memref<2x1024xf32, #tpu.memory_space<vmem>>, vector<2x512xf32>
    %14 = vector.extract_strided_slice %0 {offsets = [0, 0], sizes = [8, 1], strides = [1, 1]} : vector<8x2xf32> to vector<8x1xf32>
    %15 = vector.extract_strided_slice %13 {offsets = [0, 0], sizes = [1, 512], strides = [1, 1]} : vector<2x512xf32> to vector<1x512xf32>
    %16 = vector.broadcast %14 : vector<8x1xf32> to vector<8x512xf32>
    %17 = vector.broadcast %15 : vector<1x512xf32> to vector<8x512xf32>
    %18 = arith.mulf %16, %17 : vector<8x512xf32>
    %19 = vector.extract_strided_slice %0 {offsets = [0, 1], sizes = [8, 1], strides = [1, 1]} : vector<8x2xf32> to vector<8x1xf32>
    %20 = vector.extract_strided_slice %13 {offsets = [1, 0], sizes = [1, 512], strides = [1, 1]} : vector<2x512xf32> to vector<1x512xf32>
    %21 = vector.broadcast %19 : vector<8x1xf32> to vector<8x512xf32>
    %22 = vector.broadcast %20 : vector<1x512xf32> to vector<8x512xf32>
    %23 = arith.mulf %21, %22 : vector<8x512xf32>
    %24 = arith.addf %18, %23 : vector<8x512xf32>
    %25 = vector.broadcast %1 : vector<8x1xf32> to vector<8x512xf32>
    %26 = arith.addf %24, %25 : vector<8x512xf32>
    %27 = math.tanh %26 : vector<8x512xf32>
    %cst = arith.constant dense<0.000000e+00> : vector<16x512xf32>
    %28 = tpu.matmul %2, %27, %cst {dimension_numbers = #tpu.dot_dimension_numbers<[1], [0], [0], [1], [0, 0, 1, 1], [], []>} : vector<16x8xf32>, vector<8x512xf32>, vector<16x512xf32> -> vector<16x512xf32>
    %29 = vector.broadcast %3 : vector<16x1xf32> to vector<16x512xf32>
    %30 = arith.addf %28, %29 : vector<16x512xf32>
    %31 = math.tanh %30 : vector<16x512xf32>
    %cst_16 = arith.constant dense<0.000000e+00> : vector<32x512xf32>
    %32 = tpu.matmul %4, %31, %cst_16 {dimension_numbers = #tpu.dot_dimension_numbers<[1], [0], [0], [1], [0, 0, 1, 1], [], []>} : vector<32x16xf32>, vector<16x512xf32>, vector<32x512xf32> -> vector<32x512xf32>
    %33 = vector.broadcast %5 : vector<32x1xf32> to vector<32x512xf32>
    %34 = arith.addf %32, %33 : vector<32x512xf32>
    %35 = math.tanh %34 : vector<32x512xf32>
    %cst_17 = arith.constant dense<0.000000e+00> : vector<32x512xf32>
    %36 = tpu.matmul %6, %35, %cst_17 {dimension_numbers = #tpu.dot_dimension_numbers<[1], [0], [0], [1], [0, 0, 1, 1], [], []>} : vector<32x32xf32>, vector<32x512xf32>, vector<32x512xf32> -> vector<32x512xf32>
    %37 = vector.broadcast %7 : vector<32x1xf32> to vector<32x512xf32>
    %38 = arith.addf %36, %37 : vector<32x512xf32>
    %39 = math.tanh %38 : vector<32x512xf32>
    %cst_18 = arith.constant dense<0.000000e+00> : vector<1x512xf32>
    %40 = tpu.matmul %8, %39, %cst_18 {dimension_numbers = #tpu.dot_dimension_numbers<[1], [0], [0], [1], [0, 0, 1, 1], [], []>} : vector<1x32xf32>, vector<32x512xf32>, vector<1x512xf32> -> vector<1x512xf32>
    %41 = vector.broadcast %9 : vector<1x1xf32> to vector<1x512xf32>
    %42 = arith.addf %40, %41 : vector<1x512xf32>
    %43 = math.tanh %42 : vector<1x512xf32>
    %cst_19 = arith.constant 5.000000e-01 : f32
    %44 = vector.broadcast %cst_19 : f32 to vector<1x512xf32>
    %45 = arith.mulf %44, %43 : vector<1x512xf32>
    %cst_20 = arith.constant 5.000000e-01 : f32
    %46 = vector.broadcast %cst_20 : f32 to vector<1x512xf32>
    %47 = arith.addf %45, %46 : vector<1x512xf32>
    %c0_21 = arith.constant 0 : index
    %48 = arith.index_cast %11 : i32 to index
    %49 = vector.load %arg4[%c0_21, %48] : memref<1x1024xf32, #tpu.memory_space<vmem>>, vector<1x512xf32>
    tpu.vector_store %arg4[%c0_21, %48], %47 {strides = array<i32>} : memref<1x1024xf32, #tpu.memory_space<vmem>>, vector<1x512xf32>,
    %c1_i32 = arith.constant 1 : i32
    %c512_i32_22 = arith.constant 512 : i32
    %50 = arith.muli %c1_i32, %c512_i32_22 : i32
    %51 = tpu.assume_multiple %50, 128 : i32
    %c0_23 = arith.constant 0 : index
    %52 = arith.index_cast %51 : i32 to index
    %53 = vector.load %arg1[%c0_23, %52] : memref<2x1024xf32, #tpu.memory_space<vmem>>, vector<2x512xf32>
    %54 = vector.extract_strided_slice %0 {offsets = [0, 0], sizes = [8, 1], strides = [1, 1]} : vector<8x2xf32> to vector<8x1xf32>
    %55 = vector.extract_strided_slice %53 {offsets = [0, 0], sizes = [1, 512], strides = [1, 1]} : vector<2x512xf32> to vector<1x512xf32>
    %56 = vector.broadcast %54 : vector<8x1xf32> to vector<8x512xf32>
    %57 = vector.broadcast %55 : vector<1x512xf32> to vector<8x512xf32>
    %58 = arith.mulf %56, %57 : vector<8x512xf32>
    %59 = vector.extract_strided_slice %0 {offsets = [0, 1], sizes = [8, 1], strides = [1, 1]} : vector<8x2xf32> to vector<8x1xf32>
    %60 = vector.extract_strided_slice %53 {offsets = [1, 0], sizes = [1, 512], strides = [1, 1]} : vector<2x512xf32> to vector<1x512xf32>
    %61 = vector.broadcast %59 : vector<8x1xf32> to vector<8x512xf32>
    %62 = vector.broadcast %60 : vector<1x512xf32> to vector<8x512xf32>
    %63 = arith.mulf %61, %62 : vector<8x512xf32>
    %64 = arith.addf %58, %63 : vector<8x512xf32>
    %65 = vector.broadcast %1 : vector<8x1xf32> to vector<8x512xf32>
    %66 = arith.addf %64, %65 : vector<8x512xf32>
    %67 = math.tanh %66 : vector<8x512xf32>
    %cst_24 = arith.constant dense<0.000000e+00> : vector<16x512xf32>
    %68 = tpu.matmul %2, %67, %cst_24 {dimension_numbers = #tpu.dot_dimension_numbers<[1], [0], [0], [1], [0, 0, 1, 1], [], []>} : vector<16x8xf32>, vector<8x512xf32>, vector<16x512xf32> -> vector<16x512xf32>
    %69 = vector.broadcast %3 : vector<16x1xf32> to vector<16x512xf32>
    %70 = arith.addf %68, %69 : vector<16x512xf32>
    %71 = math.tanh %70 : vector<16x512xf32>
    %cst_25 = arith.constant dense<0.000000e+00> : vector<32x512xf32>
    %72 = tpu.matmul %4, %71, %cst_25 {dimension_numbers = #tpu.dot_dimension_numbers<[1], [0], [0], [1], [0, 0, 1, 1], [], []>} : vector<32x16xf32>, vector<16x512xf32>, vector<32x512xf32> -> vector<32x512xf32>
    %73 = vector.broadcast %5 : vector<32x1xf32> to vector<32x512xf32>
    %74 = arith.addf %72, %73 : vector<32x512xf32>
    %75 = math.tanh %74 : vector<32x512xf32>
    %cst_26 = arith.constant dense<0.000000e+00> : vector<32x512xf32>
    %76 = tpu.matmul %6, %75, %cst_26 {dimension_numbers = #tpu.dot_dimension_numbers<[1], [0], [0], [1], [0, 0, 1, 1], [], []>} : vector<32x32xf32>, vector<32x512xf32>, vector<32x512xf32> -> vector<32x512xf32>
    %77 = vector.broadcast %7 : vector<32x1xf32> to vector<32x512xf32>
    %78 = arith.addf %76, %77 : vector<32x512xf32>
    %79 = math.tanh %78 : vector<32x512xf32>
    %cst_27 = arith.constant dense<0.000000e+00> : vector<1x512xf32>
    %80 = tpu.matmul %8, %79, %cst_27 {dimension_numbers = #tpu.dot_dimension_numbers<[1], [0], [0], [1], [0, 0, 1, 1], [], []>} : vector<1x32xf32>, vector<32x512xf32>, vector<1x512xf32> -> vector<1x512xf32>
    %81 = vector.broadcast %9 : vector<1x1xf32> to vector<1x512xf32>
    %82 = arith.addf %80, %81 : vector<1x512xf32>
    %83 = math.tanh %82 : vector<1x512xf32>
    %cst_28 = arith.constant 5.000000e-01 : f32
    %84 = vector.broadcast %cst_28 : f32 to vector<1x512xf32>
    %85 = arith.mulf %84, %83 : vector<1x512xf32>
    %cst_29 = arith.constant 5.000000e-01 : f32
    %86 = vector.broadcast %cst_29 : f32 to vector<1x512xf32>
    %87 = arith.addf %85, %86 : vector<1x512xf32>
    %c0_30 = arith.constant 0 : index
    %88 = arith.index_cast %51 : i32 to index
    %89 = vector.load %arg4[%c0_30, %88] : memref<1x1024xf32, #tpu.memory_space<vmem>>, vector<1x512xf32>
    tpu.vector_store %arg4[%c0_30, %88], %87 {strides = array<i32>} : memref<1x1024xf32, #tpu.memory_space<vmem>>, vector<1x512xf32>,
    %c2_i32 = arith.constant 2 : i32
    return
  }
  func.func @transform_0(%arg0: i32) -> (i32, i32) {
    %c0_i32 = arith.constant 0 : i32
    %c0_i32_0 = arith.constant 0 : i32
    return %c0_i32, %arg0 : i32, i32
  }
  func.func @transform_1(%arg0: i32) -> (i32, i32) {
    %c0_i32 = arith.constant 0 : i32
    %c0_i32_0 = arith.constant 0 : i32
    %c0_i32_1 = arith.constant 0 : i32
    return %c0_i32, %c0_i32_0 : i32, i32
  }
  func.func @transform_2(%arg0: i32) -> (i32, i32) {
    %c0_i32 = arith.constant 0 : i32
    %c0_i32_0 = arith.constant 0 : i32
    %c0_i32_1 = arith.constant 0 : i32
    return %c0_i32, %c0_i32_0 : i32, i32
  }
  func.func @transform_3(%arg0: i32) -> (i32, i32) {
    %c0_i32 = arith.constant 0 : i32
    %c0_i32_0 = arith.constant 0 : i32
    return %c0_i32, %arg0 : i32, i32
  }
}

</mosaic_0001>

<llo_original>
// kernel: tpu_custom_call.1
$region0: #{tpu_custom_call.1}
  #allocation0 [shape = 'u32[]', space=smem, size = 0x4, offset = 0x4, fixed_abs, tag = 'smem constant byte address 0x4 - core index']
  #allocation1 [shape = 'u32[144,128]{1,0:T(1,128)}', space=vmem, size = 0x12000, scoped, tag = 'internal scratch']
  %s0 = inlined_call_operand.vmem [shape: f32[2,2048], index: 0, kind: input, shape index: {}]
  %s1 = inlined_call_operand.vmem [shape: f32[96,32], index: 1, kind: input, shape index: {}]
  %s2 = inlined_call_operand.vmem [shape: f32[96,1], index: 2, kind: input, shape index: {}]
  %s3 = inlined_call_operand.hbm [shape: f32[1,2048], index: 3, kind: output, shape index: {}]
  %s4 = sld [smem:[#allocation0]]
  $region45: #{tpu_custom_call.1} parent=0
    _
  %s6 = ssub.s32 1, %s4
  %s7 = scalar_select 0, %s6, %s4
  $region1: #{tpu_custom_call.1} parent=0
    #allocation2 [shape = 'u8[8192]{0}', space=vmem, size = 0x2000, scoped, tag = 'output window, operand 0']
    #allocation3 [shape = 's32[2]{0}', space=sflag, size = 0x8, scoped, tag = 'scoped memory for tpu_custom_call.1']
    %8 = vsyncpa [#allocation3], 0
    %s9 = scalar_lea.sflag [#allocation3], 1
    %10 = vsyncpa %s9, 0
    loop: start=0, step=1, limit=4
    $region2: #{tpu_custom_call.1} parent=1 // loop_pre_header
      _
    $region3: #{tpu_custom_call.1} parent=1 // loop_header
      %s12 = sphi 0, %s16
      %p13 = scmp.ge.s32.totalorder %s12, 4
      %s22 = sphi 0, %s24
      %s25 = sphi 0, %s22
      %s26 = sphi 0, %s25
      %s42 = sphi 0, %s26
      %s46 = sphi 0, %s46
      %s48 = sphi 0, %s46
      %s49 = sphi 0, %s48
      %s63 = sphi 0, %s49
      %s67 = sphi 0, %s67
      %s69 = sphi 0, %s67
      %s70 = sphi 0, %s69
      %s84 = sphi 0, %s70
      %s90 = sphi 0, %s92
      %s93 = sphi 0, %s90
      %s94 = sphi 0, %s93
      %s110 = sphi 0, %s94
    $region4: #{tpu_custom_call.1} parent=1 // loop_header_branch
      %15 = sbr.rel (%p13) target = $region8
    $region5: #{tpu_custom_call.1} parent=1 // loop_body
      %s17 = ssub.s32 %s12, 1
      %s18 = ssub.s32 %s12, 2
      %s19 = sadd.s32 %s12, 1
      %s20 = ssub.s32 %s12, %s19
      %p21 = scmp.eq.s32.totalorder %s20, 0
      %s23 = sadd.s32 %s22, 1
      %s24 = scalar_select %p21, %s22, %s23
      %p27 = pneg %p21
      %p28 = scmp.eq.s32.totalorder %s12, 1
      %p29 = por %p27, %p28
      %p30 = scmp.ne.s32.totalorder %s22, %s25
      %p31 = scmp.eq.s32.totalorder %s12, 0
      %p32 = por %p30, %p31
      %p33 = scmp.ne.s32.totalorder %s22, %s25
      %p34 = scmp.eq.s32.totalorder %s17, 1
      %p35 = por %p33, %p34
      %p36 = scmp.ne.s32.totalorder %s25, %s26
      %p37 = scmp.eq.s32.totalorder %s17, 0
      %p38 = por %p36, %p37
      %p39 = scmp.ne.s32.totalorder %s25, %s26
      %p40 = scmp.eq.s32.totalorder %s18, 1
      %p41 = por %p39, %p40
      %p43 = scmp.ne.s32.totalorder %s26, %s42
      %p44 = scmp.eq.s32.totalorder %s18, 0
      %p45 = por %p43, %p44
      %s47 = sadd.s32 %s46, 1
      %p50 = scmp.eq.s32.totalorder %s12, 1
      %p51 = scmp.ne.s32.totalorder %s46, %s48
      %p52 = scmp.eq.s32.totalorder %s12, 0
      %p53 = por %p51, %p52
      %p54 = scmp.ne.s32.totalorder %s46, %s48
      %p55 = scmp.eq.s32.totalorder %s17, 1
      %p56 = por %p54, %p55
      %p57 = scmp.ne.s32.totalorder %s48, %s49
      %p58 = scmp.eq.s32.totalorder %s17, 0
      %p59 = por %p57, %p58
      %p60 = scmp.ne.s32.totalorder %s48, %s49
      %p61 = scmp.eq.s32.totalorder %s18, 1
      %p62 = por %p60, %p61
      %p64 = scmp.ne.s32.totalorder %s49, %s63
      %p65 = scmp.eq.s32.totalorder %s18, 0
      %p66 = por %p64, %p65
      %s68 = sadd.s32 %s67, 1
      %p71 = scmp.eq.s32.totalorder %s12, 1
      %p72 = scmp.ne.s32.totalorder %s67, %s69
      %p73 = scmp.eq.s32.totalorder %s12, 0
      %p74 = por %p72, %p73
      %p75 = scmp.ne.s32.totalorder %s67, %s69
      %p76 = scmp.eq.s32.totalorder %s17, 1
      %p77 = por %p75, %p76
      %p78 = scmp.ne.s32.totalorder %s69, %s70
      %p79 = scmp.eq.s32.totalorder %s17, 0
      %p80 = por %p78, %p79
      %p81 = scmp.ne.s32.totalorder %s69, %s70
      %p82 = scmp.eq.s32.totalorder %s18, 1
      %p83 = por %p81, %p82
      %p85 = scmp.ne.s32.totalorder %s70, %s84
      %p86 = scmp.eq.s32.totalorder %s18, 0
      %p87 = por %p85, %p86
      %s88 = ssub.s32 %s12, %s19
      %p89 = scmp.eq.s32.totalorder %s88, 0
      %s91 = sadd.s32 %s90, 1
      %s92 = scalar_select %p89, %s90, %s91
      %p95 = pneg %p89
      %p96 = scmp.eq.s32.totalorder %s12, 1
      %p97 = por %p95, %p96
      %p98 = scmp.ne.s32.totalorder %s90, %s93
      %p99 = scmp.eq.s32.totalorder %s12, 0
      %p100 = por %p98, %p99
      %p101 = scmp.ne.s32.totalorder %s90, %s93
      %p102 = scmp.eq.s32.totalorder %s17, 1
      %p103 = por %p101, %p102
      %p104 = scmp.ne.s32.totalorder %s93, %s94
      %p105 = scmp.eq.s32.totalorder %s17, 0
      %p106 = por %p104, %p105
      %p107 = scmp.ne.s32.totalorder %s93, %s94
      %p108 = scmp.eq.s32.totalorder %s18, 1
      %p109 = por %p107, %p108
      %p111 = scmp.ne.s32.totalorder %s94, %s110
      %p112 = scmp.eq.s32.totalorder %s18, 0
      %p113 = por %p111, %p112
      %p114 = scmp.le.s32.totalorder 1, %s12
      %p115 = scmp.lt.s32.totalorder %s12, 3
      %p116 = pnand %p114, %p115
      %p117 = pneg %p116
      // Predicated region
      $region9: #{tpu_custom_call.1} parent=5 // pred_check
        _
      $region10: #{tpu_custom_call.1} parent=5 // pred_check_branch
        %119 = sbr.rel (%p116) target = $region12
      $region11: #{tpu_custom_call.1} parent=5 // pred_region
        %s120 = ssub.s32 %s12, 1
        // Predicated region
        $region13: #{tpu_custom_call.1} parent=11 // pred_check
          %p121 = pneg %p59
        $region14: #{tpu_custom_call.1} parent=11 // pred_check_branch
          %123 = sbr.rel (%p121) target = $region16
        $region15: #{tpu_custom_call.1} parent=11 // pred_region
          _
        $region16: #{tpu_custom_call.1} parent=11 // pred_fallthru
          _
        // Predicated region
        $region17: #{tpu_custom_call.1} parent=11 // pred_check
          %p124 = pneg %p80
        $region18: #{tpu_custom_call.1} parent=11 // pred_check_branch
          %126 = sbr.rel (%p124) target = $region20
        $region19: #{tpu_custom_call.1} parent=11 // pred_region
          _
        $region20: #{tpu_custom_call.1} parent=11 // pred_fallthru
          _
      $region12: #{tpu_custom_call.1} parent=5 // pred_fallthru
        _
      %p127 = scmp.lt.s32.totalorder %s12, 2
      // Predicated region
      $region21: #{tpu_custom_call.1} parent=5 // pred_check
        %p128 = pneg %p127
      $region22: #{tpu_custom_call.1} parent=5 // pred_check_branch
        %130 = sbr.rel (%p128) target = $region24
      $region23: #{tpu_custom_call.1} parent=5 // pred_region
        // Predicated region
        $region25: #{tpu_custom_call.1} parent=23 // pred_check
          %p131 = pneg %p32
        $region26: #{tpu_custom_call.1} parent=23 // pred_check_branch
          %133 = sbr.rel (%p131) target = $region28
        $region27: #{tpu_custom_call.1} parent=23 // pred_region
          %s134 = smul.u32 8, %s12
          %p135 = scmp.lt.s32.totalorder %s134, 15
          %s136 = scalar_select %p135, %s134, 15
          %s137 = smul.addr %s136, 2
          %s138 = scalar_lea.vmem %s0, %s137
          %s139 = smul.u32 8, %s12
        $region28: #{tpu_custom_call.1} parent=23 // pred_fallthru
          _
      $region24: #{tpu_custom_call.1} parent=5 // pred_fallthru
        _
      %p140 = scmp.le.s32.totalorder 1, %s12
      %p141 = scmp.lt.s32.totalorder %s12, 3
      %p142 = pnand %p140, %p141
      %p143 = pneg %p142
      // Predicated region
      $region29: #{tpu_custom_call.1} parent=5 // pred_check
        _
      $region30: #{tpu_custom_call.1} parent=5 // pred_check_branch
        %145 = sbr.rel (%p142) target = $region32
      $region31: #{tpu_custom_call.1} parent=5 // pred_region
        %s146 = ssub.s32 %s12, 1
        %s147 = smul.u32 8, %s17
        %p148 = scmp.lt.s32.totalorder %s147, 15
        %s149 = scalar_select %p148, %s147, 15
        %s150 = smul.addr %s149, 2
        %s151 = scalar_lea.vmem %s0, %s150
        %p152 = pneg %p38
        %p153 = pneg %p35
        %p154 = pneg %p59
        %p155 = pneg %p56
        %p156 = pneg %p80
        %p157 = pneg %p77
        %p158 = pneg %p106
        %p159 = pneg %p103
        %s160 = sand.u32 %s93, 1
        %s161 = scalar_lea.sflag [#allocation3], %s160
        %s162 = sand.u32 %s93, 1
        %s163 = smul.addr %s162, 8
        %s164 = scalar_lea.vmem [#allocation2], %s163
        %s165 = smul.u32 8, %s17
        %p166 = scmp.lt.s32.totalorder %s165, 15
        %s167 = scalar_select %p166, %s165, 15
        %s168 = smul.addr %s167, 2
        %s169 = scalar_lea.vmem %s0, %s168
        %s170 = smul.u32 8, %s17
        %s171 = smul.u32 8, %s17
        %v172 = vld [vmem:[%s1] sm:$0xff]
        %v173 = vld [vmem:[%s2] sm:$0xff]
        %v174 = vld [vmem:[%s1 + $0x8] sm:$0xff]
        %v175 = vld [vmem:[%s1 + $0x10] sm:$0xff]
        %v176 = vld [vmem:[%s2 + $0x8] sm:$0xff]
        %v177 = vld [vmem:[%s2 + $0x10] sm:$0xff]
        %v178 = vld [vmem:[%s1 + $0x18] sm:$0xff]
        %v179 = vld [vmem:[%s1 + $0x20] sm:$0xff]
        %v180 = vld [vmem:[%s1 + $0x28] sm:$0xff]
        %v181 = vld [vmem:[%s1 + $0x30] sm:$0xff]
        %v182 = vld [vmem:[%s2 + $0x18] sm:$0xff]
        %v183 = vld [vmem:[%s2 + $0x20] sm:$0xff]
        %v184 = vld [vmem:[%s2 + $0x28] sm:$0xff]
        %v185 = vld [vmem:[%s2 + $0x30] sm:$0xff]
        %v186 = vld [vmem:[%s1 + $0x38] sm:$0xff]
        %v187 = vld [vmem:[%s1 + $0x40] sm:$0xff]
        %v188 = vld [vmem:[%s1 + $0x48] sm:$0xff]
        %v189 = vld [vmem:[%s1 + $0x50] sm:$0xff]
        %v190 = vld [vmem:[%s2 + $0x38] sm:$0xff]
        %v191 = vld [vmem:[%s2 + $0x40] sm:$0xff]
        %v192 = vld [vmem:[%s2 + $0x48] sm:$0xff]
        %v193 = vld [vmem:[%s2 + $0x50] sm:$0xff]
        %v194 = vld [vmem:[%s1 + $0x58] sm:$0x1]
        %v195 = vld [vmem:[%s2 + $0x58] sm:$0x1]
        %v196 = vld [vmem:[%s169] sm:$0xff]
        %198 = vset.pattern.permute.xlu0 0
        %199 = vperm.xlu0 %198, %v172
        %v200 = vpop.permute.xlu0 %199
        %v203 = vlaneseq
        %v204 = vshrl.u32 %v203, 7
        %v205 = vsub.s32 0, %v204
        %v206 = vrot.slane %v196, %v205
        %v207 = vlaneseq
        %v208 = vshrl.u32 %v207, 7
        %v209 = vsub.s32 2, %v208
        %v210 = vrot.slane %v196, %v209
        %v211 = vlaneseq
        %v212 = vshrl.u32 %v211, 7
        %v213 = vsub.s32 4, %v212
        %v214 = vrot.slane %v196, %v213
        %v215 = vlaneseq
        %v216 = vshrl.u32 %v215, 7
        %v217 = vsub.s32 6, %v216
        %v218 = vrot.slane %v196, %v217
        %v223 = vlaneseq
        %v224 = vshrl.u32 %v223, 7
        %v225 = vsub.s32 0, %v224
        %v226 = vrot.slane %v206, %v225
        %v227 = vlaneseq
        %v228 = vshrl.u32 %v227, 7
        %v229 = vsub.s32 0, %v228
        %v230 = vrot.slane %v210, %v229
        %v231 = vlaneseq
        %v232 = vshrl.u32 %v231, 7
        %v233 = vsub.s32 0, %v232
        %v234 = vrot.slane %v214, %v233
        %v235 = vlaneseq
        %v236 = vshrl.u32 %v235, 7
        %v237 = vsub.s32 0, %v236
        %v238 = vrot.slane %v218, %v237
        %v239 = vmul.f32 %v200, %v226
        %v240 = vmul.f32 %v200, %v230
        %v241 = vmul.f32 %v200, %v234
        %v242 = vmul.f32 %v200, %v238
        %243 = vset.pattern.permute.xlu0 1
        %244 = vperm.xlu0 %243, %v172
        %v245 = vpop.permute.xlu0 %244
        %v247 = vlaneseq
        %v248 = vshrl.u32 %v247, 7
        %v249 = vsub.s32 1, %v248
        %v250 = vrot.slane %v196, %v249
        %v251 = vlaneseq
        %v252 = vshrl.u32 %v251, 7
        %v253 = vsub.s32 3, %v252
        %v254 = vrot.slane %v196, %v253
        %v255 = vlaneseq
        %v256 = vshrl.u32 %v255, 7
        %v257 = vsub.s32 5, %v256
        %v258 = vrot.slane %v196, %v257
        %v259 = vlaneseq
        %v260 = vshrl.u32 %v259, 7
        %v261 = vsub.s32 7, %v260
        %v262 = vrot.slane %v196, %v261
        %v267 = vlaneseq
        %v268 = vshrl.u32 %v267, 7
        %v269 = vsub.s32 1, %v268
        %v270 = vrot.slane %v250, %v269
        %v271 = vlaneseq
        %v272 = vshrl.u32 %v271, 7
        %v273 = vsub.s32 1, %v272
        %v274 = vrot.slane %v254, %v273
        %v275 = vlaneseq
        %v276 = vshrl.u32 %v275, 7
        %v277 = vsub.s32 1, %v276
        %v278 = vrot.slane %v258, %v277
        %v279 = vlaneseq
        %v280 = vshrl.u32 %v279, 7
        %v281 = vsub.s32 1, %v280
        %v282 = vrot.slane %v262, %v281
        %v283 = vmul.f32 %v245, %v270
        %v284 = vmul.f32 %v245, %v274
        %v285 = vmul.f32 %v245, %v278
        %v286 = vmul.f32 %v245, %v282
        %v287 = vadd.f32 %v239, %v283
        %v288 = vadd.f32 %v240, %v284
        %v289 = vadd.f32 %v241, %v285
        %v290 = vadd.f32 %v242, %v286
        %292 = vset.pattern.permute.xlu0 0
        %293 = vperm.xlu0 %292, %v173
        %v294 = vpop.permute.xlu0 %293
        %v296 = vadd.f32 %v287, %v294
        %v297 = vadd.f32 %v288, %v294
        %v298 = vadd.f32 %v289, %v294
        %v299 = vadd.f32 %v290, %v294
        %v300 = vtanh.pop %v296
        %v301 = vtanh.pop %v297
        %v302 = vtanh.pop %v298
        %v303 = vtanh.pop %v299
        %305 = vset.pattern.permute.xlu0 0
        %306 = vperm.xlu0 %305, %v176
        %v307 = vpop.permute.xlu0 %306
        %310 = vset.pattern.permute.xlu0 0
        %311 = vperm.xlu0 %310, %v177
        %v312 = vpop.permute.xlu0 %311
        %vm314 = vcmask 64512
        %v316 = vsel %vm314, %v174, 0
        %v319 = vsel %vm314, %v175, 0
        %321 = vmatprep.subr.mxu0 0.0
        %322 = vmatpush1.msra.mxu0 0.0
        %323 = vmatprep.subr.mxu0 0.0
        %324 = vmatpush1.msra.mxu0 0.0
        %325 = vmatprep.subr.mxu0 0.0
        %326 = vmatpush1.msra.mxu0 0.0
        %327 = vmatprep.subr.mxu0 0.0
        %328 = vmatpush1.msra.mxu0 0.0
        %329 = vmatprep.subr.mxu0 0.0
        %330 = vmatpush1.msra.mxu0 0.0
        %331 = vmatprep.subr.mxu0 0.0
        %332 = vmatpush1.msra.mxu0 0.0
        %333 = vmatprep.subr.mxu0 0.0
        %334 = vmatpush1.msra.mxu0 0.0
        %335 = vmatprep.subr.mxu0 0.0
        %336 = vmatpush1.msra.mxu0 0.0
        %337 = vmatprep.subr.mxu0 0.0
        %338 = vmatpush1.msra.mxu0 0.0
        %339 = vmatprep.subr.mxu0 0.0
        %340 = vmatpush1.msra.mxu0 0.0
        %341 = vmatprep.subr.mxu0 0.0
        %342 = vmatpush1.msra.mxu0 0.0
        %343 = vmatprep.subr.mxu0 0.0
        %344 = vmatpush1.msra.mxu0 0.0
        %345 = vmatprep.subr.mxu0 0.0
        %346 = vmatpush1.msra.mxu0 0.0
        %347 = vmatprep.subr.mxu0 0.0
        %348 = vmatpush1.msra.mxu0 0.0
        %349 = vmatprep.subr.mxu0 0.0
        %350 = vmatpush1.msra.mxu0 0.0
        %351 = vmatprep.subr.mxu0 %v301
        %352 = vmatpush1.msra.mxu0 %v300
        %353 = vmatprep.subr.mxu0 0.0
        %354 = vmatpush2.msra.mxu0 0.0
        %355 = vmatprep.subr.mxu0 0.0
        %356 = vmatpush2.msra.mxu0 0.0
        %357 = vmatprep.subr.mxu0 0.0
        %358 = vmatpush2.msra.mxu0 0.0
        %359 = vmatprep.subr.mxu0 0.0
        %360 = vmatpush2.msra.mxu0 0.0
        %361 = vmatprep.subr.mxu0 0.0
        %362 = vmatpush2.msra.mxu0 0.0
        %363 = vmatprep.subr.mxu0 0.0
        %364 = vmatpush2.msra.mxu0 0.0
        %365 = vmatprep.subr.mxu0 0.0
        %366 = vmatpush2.msra.mxu0 0.0
        %367 = vmatprep.subr.mxu0 0.0
        %368 = vmatpush2.msra.mxu0 0.0
        %369 = vmatprep.subr.mxu0 0.0
        %370 = vmatpush2.msra.mxu0 0.0
        %371 = vmatprep.subr.mxu0 0.0
        %372 = vmatpush2.msra.mxu0 0.0
        %373 = vmatprep.subr.mxu0 0.0
        %374 = vmatpush2.msra.mxu0 0.0
        %375 = vmatprep.subr.mxu0 0.0
        %376 = vmatpush2.msra.mxu0 0.0
        %377 = vmatprep.subr.mxu0 0.0
        %378 = vmatpush2.msra.mxu0 0.0
        %379 = vmatprep.subr.mxu0 0.0
        %380 = vmatpush2.msra.mxu0 0.0
        %381 = vmatprep.subr.mxu0 0.0
        %382 = vmatpush2.msra.mxu0 0.0
        %383 = vmatprep.subr.mxu0 0.0
        %384 = vmatpush2.msra.mxu0 0.0
        %385 = vmatprep.mubr.f32.mxu0 0.0
        %386 = vmatmul.mubr.f32.gmra.mxu0 %v316
        %v387 = vpop.f32.mrf.mxu0
        %v388 = vadd.f32 %v307, %v387
        %v389 = vpop.f32.mrf.mxu0
        %v390 = vadd.f32 %v307, %v389
        %391 = vmatprep.mubr.f32.mxu0 0.0
        %392 = vmatmul.mubr.f32.gmra.mxu0 %v319
        %v393 = vpop.f32.mrf.mxu0
        %v394 = vadd.f32 %v312, %v393
        %v395 = vpop.f32.mrf.mxu0
        %v396 = vadd.f32 %v312, %v395
        %397 = vdwg.mxu0
        %398 = vmatprep.subr.mxu0 0.0
        %399 = vmatpush1.msra.mxu0 0.0
        %400 = vmatprep.subr.mxu0 0.0
        %401 = vmatpush1.msra.mxu0 0.0
        %402 = vmatprep.subr.mxu0 0.0
        %403 = vmatpush1.msra.mxu0 0.0
        %404 = vmatprep.subr.mxu0 0.0
        %405 = vmatpush1.msra.mxu0 0.0
        %406 = vmatprep.subr.mxu0 0.0
        %407 = vmatpush1.msra.mxu0 0.0
        %408 = vmatprep.subr.mxu0 0.0
        %409 = vmatpush1.msra.mxu0 0.0
        %410 = vmatprep.subr.mxu0 0.0
        %411 = vmatpush1.msra.mxu0 0.0
        %412 = vmatprep.subr.mxu0 0.0
        %413 = vmatpush1.msra.mxu0 0.0
        %414 = vmatprep.subr.mxu0 0.0
        %415 = vmatpush1.msra.mxu0 0.0
        %416 = vmatprep.subr.mxu0 0.0
        %417 = vmatpush1.msra.mxu0 0.0
        %418 = vmatprep.subr.mxu0 0.0
        %419 = vmatpush1.msra.mxu0 0.0
        %420 = vmatprep.subr.mxu0 0.0
        %421 = vmatpush1.msra.mxu0 0.0
        %422 = vmatprep.subr.mxu0 0.0
        %423 = vmatpush1.msra.mxu0 0.0
        %424 = vmatprep.subr.mxu0 0.0
        %425 = vmatpush1.msra.mxu0 0.0
        %426 = vmatprep.subr.mxu0 0.0
        %427 = vmatpush1.msra.mxu0 0.0
        %428 = vmatprep.subr.mxu0 %v303
        %429 = vmatpush1.msra.mxu0 %v302
        %430 = vmatprep.subr.mxu0 0.0
        %431 = vmatpush2.msra.mxu0 0.0
        %432 = vmatprep.subr.mxu0 0.0
        %433 = vmatpush2.msra.mxu0 0.0
        %434 = vmatprep.subr.mxu0 0.0
        %435 = vmatpush2.msra.mxu0 0.0
        %436 = vmatprep.subr.mxu0 0.0
        %437 = vmatpush2.msra.mxu0 0.0
        %438 = vmatprep.subr.mxu0 0.0
        %439 = vmatpush2.msra.mxu0 0.0
        %440 = vmatprep.subr.mxu0 0.0
        %441 = vmatpush2.msra.mxu0 0.0
        %442 = vmatprep.subr.mxu0 0.0
        %443 = vmatpush2.msra.mxu0 0.0
        %444 = vmatprep.subr.mxu0 0.0
        %445 = vmatpush2.msra.mxu0 0.0
        %446 = vmatprep.subr.mxu0 0.0
        %447 = vmatpush2.msra.mxu0 0.0
        %448 = vmatprep.subr.mxu0 0.0
        %449 = vmatpush2.msra.mxu0 0.0
        %450 = vmatprep.subr.mxu0 0.0
        %451 = vmatpush2.msra.mxu0 0.0
        %452 = vmatprep.subr.mxu0 0.0
        %453 = vmatpush2.msra.mxu0 0.0
        %454 = vmatprep.subr.mxu0 0.0
        %455 = vmatpush2.msra.mxu0 0.0
        %456 = vmatprep.subr.mxu0 0.0
        %457 = vmatpush2.msra.mxu0 0.0
        %458 = vmatprep.subr.mxu0 0.0
        %459 = vmatpush2.msra.mxu0 0.0
        %460 = vmatprep.subr.mxu0 0.0
        %461 = vmatpush2.msra.mxu0 0.0
        %462 = vmatprep.mubr.f32.mxu0 0.0
        %463 = vmatmul.mubr.f32.gmra.mxu0 %v316
        %v464 = vpop.f32.mrf.mxu0
        %v465 = vadd.f32 %v307, %v464
        %v466 = vpop.f32.mrf.mxu0
        %v467 = vadd.f32 %v307, %v466
        %468 = vmatprep.mubr.f32.mxu0 0.0
        %469 = vmatmul.mubr.f32.gmra.mxu0 %v319
        %v470 = vpop.f32.mrf.mxu0
        %v471 = vadd.f32 %v312, %v470
        %v472 = vpop.f32.mrf.mxu0
        %v473 = vadd.f32 %v312, %v472
        %474 = vdwg.mxu0
        %v475 = vtanh.pop %v388
        %v476 = vtanh.pop %v390
        %v477 = vtanh.pop %v465
        %v478 = vtanh.pop %v467
        %v479 = vtanh.pop %v394
        %v480 = vtanh.pop %v396
        %v481 = vtanh.pop %v471
        %v482 = vtanh.pop %v473
        %484 = vset.pattern.permute.xlu0 0
        %485 = vperm.xlu0 %484, %v182
        %v486 = vpop.permute.xlu0 %485
        %489 = vset.pattern.permute.xlu0 0
        %490 = vperm.xlu0 %489, %v183
        %v491 = vpop.permute.xlu0 %490
        %494 = vset.pattern.permute.xlu0 0
        %495 = vperm.xlu0 %494, %v184
        %v496 = vpop.permute.xlu0 %495
        %499 = vset.pattern.permute.xlu0 0
        %500 = vperm.xlu0 %499, %v185
        %v501 = vpop.permute.xlu0 %500
        %vm503 = vcmask 130048
        %v505 = vsel %vm503, %v178, 0
        %v508 = vsel %vm503, %v179, 0
        %v511 = vsel %vm503, %v180, 0
        %v514 = vsel %vm503, %v181, 0
        %516 = vmatprep.subr.mxu0 0.0
        %517 = vmatpush1.msra.mxu0 0.0
        %518 = vmatprep.subr.mxu0 0.0
        %519 = vmatpush1.msra.mxu0 0.0
        %520 = vmatprep.subr.mxu0 0.0
        %521 = vmatpush1.msra.mxu0 0.0
        %522 = vmatprep.subr.mxu0 0.0
        %523 = vmatpush1.msra.mxu0 0.0
        %524 = vmatprep.subr.mxu0 0.0
        %525 = vmatpush1.msra.mxu0 0.0
        %526 = vmatprep.subr.mxu0 0.0
        %527 = vmatpush1.msra.mxu0 0.0
        %528 = vmatprep.subr.mxu0 0.0
        %529 = vmatpush1.msra.mxu0 0.0
        %530 = vmatprep.subr.mxu0 0.0
        %531 = vmatpush1.msra.mxu0 0.0
        %532 = vmatprep.subr.mxu0 0.0
        %533 = vmatpush1.msra.mxu0 0.0
        %534 = vmatprep.subr.mxu0 0.0
        %535 = vmatpush1.msra.mxu0 0.0
        %536 = vmatprep.subr.mxu0 0.0
        %537 = vmatpush1.msra.mxu0 0.0
        %538 = vmatprep.subr.mxu0 0.0
        %539 = vmatpush1.msra.mxu0 0.0
        %540 = vmatprep.subr.mxu0 0.0
        %541 = vmatpush1.msra.mxu0 0.0
        %542 = vmatprep.subr.mxu0 0.0
        %543 = vmatpush1.msra.mxu0 0.0
        %544 = vmatprep.subr.mxu0 %v480
        %545 = vmatpush1.msra.mxu0 %v479
        %546 = vmatprep.subr.mxu0 %v476
        %547 = vmatpush1.msra.mxu0 %v475
        %548 = vmatprep.subr.mxu0 0.0
        %549 = vmatpush2.msra.mxu0 0.0
        %550 = vmatprep.subr.mxu0 0.0
        %551 = vmatpush2.msra.mxu0 0.0
        %552 = vmatprep.subr.mxu0 0.0
        %553 = vmatpush2.msra.mxu0 0.0
        %554 = vmatprep.subr.mxu0 0.0
        %555 = vmatpush2.msra.mxu0 0.0
        %556 = vmatprep.subr.mxu0 0.0
        %557 = vmatpush2.msra.mxu0 0.0
        %558 = vmatprep.subr.mxu0 0.0
        %559 = vmatpush2.msra.mxu0 0.0
        %560 = vmatprep.subr.mxu0 0.0
        %561 = vmatpush2.msra.mxu0 0.0
        %562 = vmatprep.subr.mxu0 0.0
        %563 = vmatpush2.msra.mxu0 0.0
        %564 = vmatprep.subr.mxu0 0.0
        %565 = vmatpush2.msra.mxu0 0.0
        %566 = vmatprep.subr.mxu0 0.0
        %567 = vmatpush2.msra.mxu0 0.0
        %568 = vmatprep.subr.mxu0 0.0
        %569 = vmatpush2.msra.mxu0 0.0
        %570 = vmatprep.subr.mxu0 0.0
        %571 = vmatpush2.msra.mxu0 0.0
        %572 = vmatprep.subr.mxu0 0.0
        %573 = vmatpush2.msra.mxu0 0.0
        %574 = vmatprep.subr.mxu0 0.0
        %575 = vmatpush2.msra.mxu0 0.0
        %576 = vmatprep.subr.mxu0 0.0
        %577 = vmatpush2.msra.mxu0 0.0
        %578 = vmatprep.subr.mxu0 0.0
        %579 = vmatpush2.msra.mxu0 0.0
        %580 = vmatprep.mubr.f32.mxu0 0.0
        %581 = vmatmul.mubr.f32.gmra.mxu0 %v505
        %v582 = vpop.f32.mrf.mxu0
        %v583 = vadd.f32 %v486, %v582
        %v584 = vpop.f32.mrf.mxu0
        %v585 = vadd.f32 %v486, %v584
        %586 = vmatprep.mubr.f32.mxu0 0.0
        %587 = vmatmul.mubr.f32.gmra.mxu0 %v508
        %v588 = vpop.f32.mrf.mxu0
        %v589 = vadd.f32 %v491, %v588
        %v590 = vpop.f32.mrf.mxu0
        %v591 = vadd.f32 %v491, %v590
        %592 = vmatprep.mubr.f32.mxu0 0.0
        %593 = vmatmul.mubr.f32.gmra.mxu0 %v511
        %v594 = vpop.f32.mrf.mxu0
        %v595 = vadd.f32 %v496, %v594
        %v596 = vpop.f32.mrf.mxu0
        %v597 = vadd.f32 %v496, %v596
        %598 = vmatprep.mubr.f32.mxu0 0.0
        %599 = vmatmul.mubr.f32.gmra.mxu0 %v514
        %v600 = vpop.f32.mrf.mxu0
        %v601 = vadd.f32 %v501, %v600
        %v602 = vpop.f32.mrf.mxu0
        %v603 = vadd.f32 %v501, %v602
        %604 = vdwg.mxu0
        %605 = vmatprep.subr.mxu0 0.0
        %606 = vmatpush1.msra.mxu0 0.0
        %607 = vmatprep.subr.mxu0 0.0
        %608 = vmatpush1.msra.mxu0 0.0
        %609 = vmatprep.subr.mxu0 0.0
        %610 = vmatpush1.msra.mxu0 0.0
        %611 = vmatprep.subr.mxu0 0.0
        %612 = vmatpush1.msra.mxu0 0.0
        %613 = vmatprep.subr.mxu0 0.0
        %614 = vmatpush1.msra.mxu0 0.0
        %615 = vmatprep.subr.mxu0 0.0
        %616 = vmatpush1.msra.mxu0 0.0
        %617 = vmatprep.subr.mxu0 0.0
        %618 = vmatpush1.msra.mxu0 0.0
        %619 = vmatprep.subr.mxu0 0.0
        %620 = vmatpush1.msra.mxu0 0.0
        %621 = vmatprep.subr.mxu0 0.0
        %622 = vmatpush1.msra.mxu0 0.0
        %623 = vmatprep.subr.mxu0 0.0
        %624 = vmatpush1.msra.mxu0 0.0
        %625 = vmatprep.subr.mxu0 0.0
        %626 = vmatpush1.msra.mxu0 0.0
        %627 = vmatprep.subr.mxu0 0.0
        %628 = vmatpush1.msra.mxu0 0.0
        %629 = vmatprep.subr.mxu0 0.0
        %630 = vmatpush1.msra.mxu0 0.0
        %631 = vmatprep.subr.mxu0 0.0
        %632 = vmatpush1.msra.mxu0 0.0
        %633 = vmatprep.subr.mxu0 %v482
        %634 = vmatpush1.msra.mxu0 %v481
        %635 = vmatprep.subr.mxu0 %v478
        %636 = vmatpush1.msra.mxu0 %v477
        %637 = vmatprep.subr.mxu0 0.0
        %638 = vmatpush2.msra.mxu0 0.0
        %639 = vmatprep.subr.mxu0 0.0
        %640 = vmatpush2.msra.mxu0 0.0
        %641 = vmatprep.subr.mxu0 0.0
        %642 = vmatpush2.msra.mxu0 0.0
        %643 = vmatprep.subr.mxu0 0.0
        %644 = vmatpush2.msra.mxu0 0.0
        %645 = vmatprep.subr.mxu0 0.0
        %646 = vmatpush2.msra.mxu0 0.0
        %647 = vmatprep.subr.mxu0 0.0
        %648 = vmatpush2.msra.mxu0 0.0
        %649 = vmatprep.subr.mxu0 0.0
        %650 = vmatpush2.msra.mxu0 0.0
        %651 = vmatprep.subr.mxu0 0.0
        %652 = vmatpush2.msra.mxu0 0.0
        %653 = vmatprep.subr.mxu0 0.0
        %654 = vmatpush2.msra.mxu0 0.0
        %655 = vmatprep.subr.mxu0 0.0
        %656 = vmatpush2.msra.mxu0 0.0
        %657 = vmatprep.subr.mxu0 0.0
        %658 = vmatpush2.msra.mxu0 0.0
        %659 = vmatprep.subr.mxu0 0.0
        %660 = vmatpush2.msra.mxu0 0.0
        %661 = vmatprep.subr.mxu0 0.0
        %662 = vmatpush2.msra.mxu0 0.0
        %663 = vmatprep.subr.mxu0 0.0
        %664 = vmatpush2.msra.mxu0 0.0
        %665 = vmatprep.subr.mxu0 0.0
        %666 = vmatpush2.msra.mxu0 0.0
        %667 = vmatprep.subr.mxu0 0.0
        %668 = vmatpush2.msra.mxu0 0.0
        %669 = vmatprep.mubr.f32.mxu0 0.0
        %670 = vmatmul.mubr.f32.gmra.mxu0 %v505
        %v671 = vpop.f32.mrf.mxu0
        %v672 = vadd.f32 %v486, %v671
        %v673 = vpop.f32.mrf.mxu0
        %v674 = vadd.f32 %v486, %v673
        %675 = vmatprep.mubr.f32.mxu0 0.0
        %676 = vmatmul.mubr.f32.gmra.mxu0 %v508
        %v677 = vpop.f32.mrf.mxu0
        %v678 = vadd.f32 %v491, %v677
        %v679 = vpop.f32.mrf.mxu0
        %v680 = vadd.f32 %v491, %v679
        %681 = vmatprep.mubr.f32.mxu0 0.0
        %682 = vmatmul.mubr.f32.gmra.mxu0 %v511
        %v683 = vpop.f32.mrf.mxu0
        %v684 = vadd.f32 %v496, %v683
        %v685 = vpop.f32.mrf.mxu0
        %v686 = vadd.f32 %v496, %v685
        %687 = vmatprep.mubr.f32.mxu0 0.0
        %688 = vmatmul.mubr.f32.gmra.mxu0 %v514
        %v689 = vpop.f32.mrf.mxu0
        %v690 = vadd.f32 %v501, %v689
        %v691 = vpop.f32.mrf.mxu0
        %v692 = vadd.f32 %v501, %v691
        %693 = vdwg.mxu0
        %v694 = vtanh.pop %v583
        %v695 = vtanh.pop %v585
        %v696 = vtanh.pop %v672
        %v697 = vtanh.pop %v674
        %v698 = vtanh.pop %v589
        %v699 = vtanh.pop %v591
        %v700 = vtanh.pop %v678
        %v701 = vtanh.pop %v680
        %v702 = vtanh.pop %v595
        %v703 = vtanh.pop %v597
        %v704 = vtanh.pop %v684
        %v705 = vtanh.pop %v686
        %v706 = vtanh.pop %v601
        %v707 = vtanh.pop %v603
        %v708 = vtanh.pop %v690
        %v709 = vtanh.pop %v692
        %711 = vset.pattern.permute.xlu0 0
        %712 = vperm.xlu0 %711, %v190
        %v713 = vpop.permute.xlu0 %712
        %716 = vset.pattern.permute.xlu0 0
        %717 = vperm.xlu0 %716, %v191
        %v718 = vpop.permute.xlu0 %717
        %721 = vset.pattern.permute.xlu0 0
        %722 = vperm.xlu0 %721, %v192
        %v723 = vpop.permute.xlu0 %722
        %726 = vset.pattern.permute.xlu0 0
        %727 = vperm.xlu0 %726, %v193
        %v728 = vpop.permute.xlu0 %727
        %vm730 = vcmask 261120
        %v732 = vsel %vm730, %v186, 0
        %v735 = vsel %vm730, %v187, 0
        %v738 = vsel %vm730, %v188, 0
        %v741 = vsel %vm730, %v189, 0
        %743 = vmatprep.subr.mxu0 0.0
        %744 = vmatpush1.msra.mxu0 0.0
        %745 = vmatprep.subr.mxu0 0.0
        %746 = vmatpush1.msra.mxu0 0.0
        %747 = vmatprep.subr.mxu0 0.0
        %748 = vmatpush1.msra.mxu0 0.0
        %749 = vmatprep.subr.mxu0 0.0
        %750 = vmatpush1.msra.mxu0 0.0
        %751 = vmatprep.subr.mxu0 0.0
        %752 = vmatpush1.msra.mxu0 0.0
        %753 = vmatprep.subr.mxu0 0.0
        %754 = vmatpush1.msra.mxu0 0.0
        %755 = vmatprep.subr.mxu0 0.0
        %756 = vmatpush1.msra.mxu0 0.0
        %757 = vmatprep.subr.mxu0 0.0
        %758 = vmatpush1.msra.mxu0 0.0
        %759 = vmatprep.subr.mxu0 0.0
        %760 = vmatpush1.msra.mxu0 0.0
        %761 = vmatprep.subr.mxu0 0.0
        %762 = vmatpush1.msra.mxu0 0.0
        %763 = vmatprep.subr.mxu0 0.0
        %764 = vmatpush1.msra.mxu0 0.0
        %765 = vmatprep.subr.mxu0 0.0
        %766 = vmatpush1.msra.mxu0 0.0
        %767 = vmatprep.subr.mxu0 %v707
        %768 = vmatpush1.msra.mxu0 %v706
        %769 = vmatprep.subr.mxu0 %v703
        %770 = vmatpush1.msra.mxu0 %v702
        %771 = vmatprep.subr.mxu0 %v699
        %772 = vmatpush1.msra.mxu0 %v698
        %773 = vmatprep.subr.mxu0 %v695
        %774 = vmatpush1.msra.mxu0 %v694
        %775 = vmatprep.subr.mxu0 0.0
        %776 = vmatpush2.msra.mxu0 0.0
        %777 = vmatprep.subr.mxu0 0.0
        %778 = vmatpush2.msra.mxu0 0.0
        %779 = vmatprep.subr.mxu0 0.0
        %780 = vmatpush2.msra.mxu0 0.0
        %781 = vmatprep.subr.mxu0 0.0
        %782 = vmatpush2.msra.mxu0 0.0
        %783 = vmatprep.subr.mxu0 0.0
        %784 = vmatpush2.msra.mxu0 0.0
        %785 = vmatprep.subr.mxu0 0.0
        %786 = vmatpush2.msra.mxu0 0.0
        %787 = vmatprep.subr.mxu0 0.0
        %788 = vmatpush2.msra.mxu0 0.0
        %789 = vmatprep.subr.mxu0 0.0
        %790 = vmatpush2.msra.mxu0 0.0
        %791 = vmatprep.subr.mxu0 0.0
        %792 = vmatpush2.msra.mxu0 0.0
        %793 = vmatprep.subr.mxu0 0.0
        %794 = vmatpush2.msra.mxu0 0.0
        %795 = vmatprep.subr.mxu0 0.0
        %796 = vmatpush2.msra.mxu0 0.0
        %797 = vmatprep.subr.mxu0 0.0
        %798 = vmatpush2.msra.mxu0 0.0
        %799 = vmatprep.subr.mxu0 0.0
        %800 = vmatpush2.msra.mxu0 0.0
        %801 = vmatprep.subr.mxu0 0.0
        %802 = vmatpush2.msra.mxu0 0.0
        %803 = vmatprep.subr.mxu0 0.0
        %804 = vmatpush2.msra.mxu0 0.0
        %805 = vmatprep.subr.mxu0 0.0
        %806 = vmatpush2.msra.mxu0 0.0
        %807 = vmatprep.mubr.f32.mxu0 0.0
        %808 = vmatmul.mubr.f32.gmra.mxu0 %v732
        %v809 = vpop.f32.mrf.mxu0
        %v810 = vadd.f32 %v713, %v809
        %v811 = vpop.f32.mrf.mxu0
        %v812 = vadd.f32 %v713, %v811
        %813 = vmatprep.mubr.f32.mxu0 0.0
        %814 = vmatmul.mubr.f32.gmra.mxu0 %v735
        %v815 = vpop.f32.mrf.mxu0
        %v816 = vadd.f32 %v718, %v815
        %v817 = vpop.f32.mrf.mxu0
        %v818 = vadd.f32 %v718, %v817
        %819 = vmatprep.mubr.f32.mxu0 0.0
        %820 = vmatmul.mubr.f32.gmra.mxu0 %v738
        %v821 = vpop.f32.mrf.mxu0
        %v822 = vadd.f32 %v723, %v821
        %v823 = vpop.f32.mrf.mxu0
        %v824 = vadd.f32 %v723, %v823
        %825 = vmatprep.mubr.f32.mxu0 0.0
        %826 = vmatmul.mubr.f32.gmra.mxu0 %v741
        %v827 = vpop.f32.mrf.mxu0
        %v828 = vadd.f32 %v728, %v827
        %v829 = vpop.f32.mrf.mxu0
        %v830 = vadd.f32 %v728, %v829
        %831 = vdwg.mxu0
        %832 = vmatprep.subr.mxu0 0.0
        %833 = vmatpush1.msra.mxu0 0.0
        %834 = vmatprep.subr.mxu0 0.0
        %835 = vmatpush1.msra.mxu0 0.0
        %836 = vmatprep.subr.mxu0 0.0
        %837 = vmatpush1.msra.mxu0 0.0
        %838 = vmatprep.subr.mxu0 0.0
        %839 = vmatpush1.msra.mxu0 0.0
        %840 = vmatprep.subr.mxu0 0.0
        %841 = vmatpush1.msra.mxu0 0.0
        %842 = vmatprep.subr.mxu0 0.0
        %843 = vmatpush1.msra.mxu0 0.0
        %844 = vmatprep.subr.mxu0 0.0
        %845 = vmatpush1.msra.mxu0 0.0
        %846 = vmatprep.subr.mxu0 0.0
        %847 = vmatpush1.msra.mxu0 0.0
        %848 = vmatprep.subr.mxu0 0.0
        %849 = vmatpush1.msra.mxu0 0.0
        %850 = vmatprep.subr.mxu0 0.0
        %851 = vmatpush1.msra.mxu0 0.0
        %852 = vmatprep.subr.mxu0 0.0
        %853 = vmatpush1.msra.mxu0 0.0
        %854 = vmatprep.subr.mxu0 0.0
        %855 = vmatpush1.msra.mxu0 0.0
        %856 = vmatprep.subr.mxu0 %v709
        %857 = vmatpush1.msra.mxu0 %v708
        %858 = vmatprep.subr.mxu0 %v705
        %859 = vmatpush1.msra.mxu0 %v704
        %860 = vmatprep.subr.mxu0 %v701
        %861 = vmatpush1.msra.mxu0 %v700
        %862 = vmatprep.subr.mxu0 %v697
        %863 = vmatpush1.msra.mxu0 %v696
        %864 = vmatprep.subr.mxu0 0.0
        %865 = vmatpush2.msra.mxu0 0.0
        %866 = vmatprep.subr.mxu0 0.0
        %867 = vmatpush2.msra.mxu0 0.0
        %868 = vmatprep.subr.mxu0 0.0
        %869 = vmatpush2.msra.mxu0 0.0
        %870 = vmatprep.subr.mxu0 0.0
        %871 = vmatpush2.msra.mxu0 0.0
        %872 = vmatprep.subr.mxu0 0.0
        %873 = vmatpush2.msra.mxu0 0.0
        %874 = vmatprep.subr.mxu0 0.0
        %875 = vmatpush2.msra.mxu0 0.0
        %876 = vmatprep.subr.mxu0 0.0
        %877 = vmatpush2.msra.mxu0 0.0
        %878 = vmatprep.subr.mxu0 0.0
        %879 = vmatpush2.msra.mxu0 0.0
        %880 = vmatprep.subr.mxu0 0.0
        %881 = vmatpush2.msra.mxu0 0.0
        %882 = vmatprep.subr.mxu0 0.0
        %883 = vmatpush2.msra.mxu0 0.0
        %884 = vmatprep.subr.mxu0 0.0
        %885 = vmatpush2.msra.mxu0 0.0
        %886 = vmatprep.subr.mxu0 0.0
        %887 = vmatpush2.msra.mxu0 0.0
        %888 = vmatprep.subr.mxu0 0.0
        %889 = vmatpush2.msra.mxu0 0.0
        %890 = vmatprep.subr.mxu0 0.0
        %891 = vmatpush2.msra.mxu0 0.0
        %892 = vmatprep.subr.mxu0 0.0
        %893 = vmatpush2.msra.mxu0 0.0
        %894 = vmatprep.subr.mxu0 0.0
        %895 = vmatpush2.msra.mxu0 0.0
        %896 = vmatprep.mubr.f32.mxu0 0.0
        %897 = vmatmul.mubr.f32.gmra.mxu0 %v732
        %v898 = vpop.f32.mrf.mxu0
        %v899 = vadd.f32 %v713, %v898
        %v900 = vpop.f32.mrf.mxu0
        %v901 = vadd.f32 %v713, %v900
        %902 = vmatprep.mubr.f32.mxu0 0.0
        %903 = vmatmul.mubr.f32.gmra.mxu0 %v735
        %v904 = vpop.f32.mrf.mxu0
        %v905 = vadd.f32 %v718, %v904
        %v906 = vpop.f32.mrf.mxu0
        %v907 = vadd.f32 %v718, %v906
        %908 = vmatprep.mubr.f32.mxu0 0.0
        %909 = vmatmul.mubr.f32.gmra.mxu0 %v738
        %v910 = vpop.f32.mrf.mxu0
        %v911 = vadd.f32 %v723, %v910
        %v912 = vpop.f32.mrf.mxu0
        %v913 = vadd.f32 %v723, %v912
        %914 = vmatprep.mubr.f32.mxu0 0.0
        %915 = vmatmul.mubr.f32.gmra.mxu0 %v741
        %v916 = vpop.f32.mrf.mxu0
        %v917 = vadd.f32 %v728, %v916
        %v918 = vpop.f32.mrf.mxu0
        %v919 = vadd.f32 %v728, %v918
        %920 = vdwg.mxu0
        %v921 = vtanh.pop %v810
        %v922 = vtanh.pop %v812
        %v923 = vtanh.pop %v899
        %v924 = vtanh.pop %v901
        %v925 = vtanh.pop %v816
        %v926 = vtanh.pop %v818
        %v927 = vtanh.pop %v905
        %v928 = vtanh.pop %v907
        %v929 = vtanh.pop %v822
        %v930 = vtanh.pop %v824
        %v931 = vtanh.pop %v911
        %v932 = vtanh.pop %v913
        %v933 = vtanh.pop %v828
        %v934 = vtanh.pop %v830
        %v935 = vtanh.pop %v917
        %v936 = vtanh.pop %v919
        %938 = vset.pattern.permute.xlu0 0
        %939 = vperm.xlu0 %938, %v195
        %v940 = vpop.permute.xlu0 %939
        %v943 = vsel %vm730, %v194, 0
        %945 = vmatprep.subr.mxu0 0.0
        %946 = vmatpush1.msra.mxu0 0.0
        %947 = vmatprep.subr.mxu0 0.0
        %948 = vmatpush1.msra.mxu0 0.0
        %949 = vmatprep.subr.mxu0 0.0
        %950 = vmatpush1.msra.mxu0 0.0
        %951 = vmatprep.subr.mxu0 0.0
        %952 = vmatpush1.msra.mxu0 0.0
        %953 = vmatprep.subr.mxu0 0.0
        %954 = vmatpush1.msra.mxu0 0.0
        %955 = vmatprep.subr.mxu0 0.0
        %956 = vmatpush1.msra.mxu0 0.0
        %957 = vmatprep.subr.mxu0 0.0
        %958 = vmatpush1.msra.mxu0 0.0
        %959 = vmatprep.subr.mxu0 0.0
        %960 = vmatpush1.msra.mxu0 0.0
        %961 = vmatprep.subr.mxu0 0.0
        %962 = vmatpush1.msra.mxu0 0.0
        %963 = vmatprep.subr.mxu0 0.0
        %964 = vmatpush1.msra.mxu0 0.0
        %965 = vmatprep.subr.mxu0 0.0
        %966 = vmatpush1.msra.mxu0 0.0
        %967 = vmatprep.subr.mxu0 0.0
        %968 = vmatpush1.msra.mxu0 0.0
        %969 = vmatprep.subr.mxu0 %v934
        %970 = vmatpush1.msra.mxu0 %v933
        %971 = vmatprep.subr.mxu0 %v930
        %972 = vmatpush1.msra.mxu0 %v929
        %973 = vmatprep.subr.mxu0 %v926
        %974 = vmatpush1.msra.mxu0 %v925
        %975 = vmatprep.subr.mxu0 %v922
        %976 = vmatpush1.msra.mxu0 %v921
        %977 = vmatprep.subr.mxu0 0.0
        %978 = vmatpush2.msra.mxu0 0.0
        %979 = vmatprep.subr.mxu0 0.0
        %980 = vmatpush2.msra.mxu0 0.0
        %981 = vmatprep.subr.mxu0 0.0
        %982 = vmatpush2.msra.mxu0 0.0
        %983 = vmatprep.subr.mxu0 0.0
        %984 = vmatpush2.msra.mxu0 0.0
        %985 = vmatprep.subr.mxu0 0.0
        %986 = vmatpush2.msra.mxu0 0.0
        %987 = vmatprep.subr.mxu0 0.0
        %988 = vmatpush2.msra.mxu0 0.0
        %989 = vmatprep.subr.mxu0 0.0
        %990 = vmatpush2.msra.mxu0 0.0
        %991 = vmatprep.subr.mxu0 0.0
        %992 = vmatpush2.msra.mxu0 0.0
        %993 = vmatprep.subr.mxu0 0.0
        %994 = vmatpush2.msra.mxu0 0.0
        %995 = vmatprep.subr.mxu0 0.0
        %996 = vmatpush2.msra.mxu0 0.0
        %997 = vmatprep.subr.mxu0 0.0
        %998 = vmatpush2.msra.mxu0 0.0
        %999 = vmatprep.subr.mxu0 0.0
        %1000 = vmatpush2.msra.mxu0 0.0
        %1001 = vmatprep.subr.mxu0 0.0
        %1002 = vmatpush2.msra.mxu0 0.0
        %1003 = vmatprep.subr.mxu0 0.0
        %1004 = vmatpush2.msra.mxu0 0.0
        %1005 = vmatprep.subr.mxu0 0.0
        %1006 = vmatpush2.msra.mxu0 0.0
        %1007 = vmatprep.subr.mxu0 0.0
        %1008 = vmatpush2.msra.mxu0 0.0
        %1009 = vmatprep.mubr.f32.mxu0 0.0
        %1010 = vmatmul.mubr.f32.gmra.mxu0 %v943
        %v1011 = vpop.f32.mrf.mxu0
        %v1012 = vadd.f32 %v940, %v1011
        %v1013 = vpop.f32.mrf.mxu0
        %v1014 = vadd.f32 %v940, %v1013
        %1015 = vdwg.mxu0
        %1016 = vmatprep.subr.mxu0 0.0
        %1017 = vmatpush1.msra.mxu0 0.0
        %1018 = vmatprep.subr.mxu0 0.0
        %1019 = vmatpush1.msra.mxu0 0.0
        %1020 = vmatprep.subr.mxu0 0.0
        %1021 = vmatpush1.msra.mxu0 0.0
        %1022 = vmatprep.subr.mxu0 0.0
        %1023 = vmatpush1.msra.mxu0 0.0
        %1024 = vmatprep.subr.mxu0 0.0
        %1025 = vmatpush1.msra.mxu0 0.0
        %1026 = vmatprep.subr.mxu0 0.0
        %1027 = vmatpush1.msra.mxu0 0.0
        %1028 = vmatprep.subr.mxu0 0.0
        %1029 = vmatpush1.msra.mxu0 0.0
        %1030 = vmatprep.subr.mxu0 0.0
        %1031 = vmatpush1.msra.mxu0 0.0
        %1032 = vmatprep.subr.mxu0 0.0
        %1033 = vmatpush1.msra.mxu0 0.0
        %1034 = vmatprep.subr.mxu0 0.0
        %1035 = vmatpush1.msra.mxu0 0.0
        %1036 = vmatprep.subr.mxu0 0.0
        %1037 = vmatpush1.msra.mxu0 0.0
        %1038 = vmatprep.subr.mxu0 0.0
        %1039 = vmatpush1.msra.mxu0 0.0
        %1040 = vmatprep.subr.mxu0 %v936
        %1041 = vmatpush1.msra.mxu0 %v935
        %1042 = vmatprep.subr.mxu0 %v932
        %1043 = vmatpush1.msra.mxu0 %v931
        %1044 = vmatprep.subr.mxu0 %v928
        %1045 = vmatpush1.msra.mxu0 %v927
        %1046 = vmatprep.subr.mxu0 %v924
        %1047 = vmatpush1.msra.mxu0 %v923
        %1048 = vmatprep.subr.mxu0 0.0
        %1049 = vmatpush2.msra.mxu0 0.0
        %1050 = vmatprep.subr.mxu0 0.0
        %1051 = vmatpush2.msra.mxu0 0.0
        %1052 = vmatprep.subr.mxu0 0.0
        %1053 = vmatpush2.msra.mxu0 0.0
        %1054 = vmatprep.subr.mxu0 0.0
        %1055 = vmatpush2.msra.mxu0 0.0
        %1056 = vmatprep.subr.mxu0 0.0
        %1057 = vmatpush2.msra.mxu0 0.0
        %1058 = vmatprep.subr.mxu0 0.0
        %1059 = vmatpush2.msra.mxu0 0.0
        %1060 = vmatprep.subr.mxu0 0.0
        %1061 = vmatpush2.msra.mxu0 0.0
        %1062 = vmatprep.subr.mxu0 0.0
        %1063 = vmatpush2.msra.mxu0 0.0
        %1064 = vmatprep.subr.mxu0 0.0
        %1065 = vmatpush2.msra.mxu0 0.0
        %1066 = vmatprep.subr.mxu0 0.0
        %1067 = vmatpush2.msra.mxu0 0.0
        %1068 = vmatprep.subr.mxu0 0.0
        %1069 = vmatpush2.msra.mxu0 0.0
        %1070 = vmatprep.subr.mxu0 0.0
        %1071 = vmatpush2.msra.mxu0 0.0
        %1072 = vmatprep.subr.mxu0 0.0
        %1073 = vmatpush2.msra.mxu0 0.0
        %1074 = vmatprep.subr.mxu0 0.0
        %1075 = vmatpush2.msra.mxu0 0.0
        %1076 = vmatprep.subr.mxu0 0.0
        %1077 = vmatpush2.msra.mxu0 0.0
        %1078 = vmatprep.subr.mxu0 0.0
        %1079 = vmatpush2.msra.mxu0 0.0
        %1080 = vmatprep.mubr.f32.mxu0 0.0
        %1081 = vmatmul.mubr.f32.gmra.mxu0 %v943
        %v1082 = vpop.f32.mrf.mxu0
        %v1083 = vadd.f32 %v940, %v1082
        %v1084 = vpop.f32.mrf.mxu0
        %v1085 = vadd.f32 %v940, %v1084
        %1086 = vdwg.mxu0
        %v1087 = vtanh.pop %v1012
        %v1088 = vtanh.pop %v1014
        %v1089 = vtanh.pop %v1083
        %v1090 = vtanh.pop %v1085
        %v1091 = vmul.f32 %v1087, 0.5
        %v1092 = vmul.f32 %v1088, 0.5
        %v1093 = vmul.f32 %v1089, 0.5
        %v1094 = vmul.f32 %v1090, 0.5
        %v1095 = vadd.f32 %v1091, 0.5
        %v1096 = vadd.f32 %v1092, 0.5
        %v1097 = vadd.f32 %v1093, 0.5
        %v1098 = vadd.f32 %v1094, 0.5
        %v1103 = vcombine.low %v1095, %v1096
        %v1104 = vcombine.low %v1097, %v1098
        %v1106 = vunpack.c.l.s4 1966171168
        %v1107 = vunpack.c.0.s8 %v1106
        %v1108 = vlaneseq
        %v1109 = vshrl.u32 %v1108, 7
        %v1110 = vsub.s32 %v1107, %v1109
        %v1111 = vrot.slane %v1103, %v1110
        %v1113 = vunpack.c.l.s4 1966171168
        %v1114 = vunpack.c.0.s8 %v1113
        %v1115 = vlaneseq
        %v1116 = vshrl.u32 %v1115, 7
        %v1117 = vsub.s32 %v1114, %v1116
        %v1118 = vrot.slane %v1104, %v1117
        %v1119 = vcombine.low %v1111, %v1118
        %v1121 = vunpack.c.l.s4 1966171168
        %v1122 = vunpack.c.0.s8 %v1121
        %v1123 = vlaneseq
        %v1124 = vshrl.u32 %v1123, 7
        %v1125 = vsub.s32 %v1122, %v1124
        %v1126 = vrot.slane %v1119, %v1125
        %v1128 = vlaneseq
        %vm1129 = vcmp.ge.s32.totalorder %v1128, 0
        %vm1130 = vcmp.lt.s32.totalorder %v1128, 512
        %vm1131 = vmand %vm1129, %vm1130
        %1132 = vst.msk [vmem:[%s164] sm:$0xf] %vm1131, %v1126
        %s1133 = scalar_lea.vmem %s169, 8
        %v1134 = vld [vmem:[%s1133] sm:$0xff]
        %v1136 = vlaneseq
        %v1137 = vshrl.u32 %v1136, 7
        %v1138 = vsub.s32 0, %v1137
        %v1139 = vrot.slane %v1134, %v1138
        %v1140 = vlaneseq
        %v1141 = vshrl.u32 %v1140, 7
        %v1142 = vsub.s32 2, %v1141
        %v1143 = vrot.slane %v1134, %v1142
        %v1144 = vlaneseq
        %v1145 = vshrl.u32 %v1144, 7
        %v1146 = vsub.s32 4, %v1145
        %v1147 = vrot.slane %v1134, %v1146
        %v1148 = vlaneseq
        %v1149 = vshrl.u32 %v1148, 7
        %v1150 = vsub.s32 6, %v1149
        %v1151 = vrot.slane %v1134, %v1150
        %v1156 = vlaneseq
        %v1157 = vshrl.u32 %v1156, 7
        %v1158 = vsub.s32 0, %v1157
        %v1159 = vrot.slane %v1139, %v1158
        %v1160 = vlaneseq
        %v1161 = vshrl.u32 %v1160, 7
        %v1162 = vsub.s32 0, %v1161
        %v1163 = vrot.slane %v1143, %v1162
        %v1164 = vlaneseq
        %v1165 = vshrl.u32 %v1164, 7
        %v1166 = vsub.s32 0, %v1165
        %v1167 = vrot.slane %v1147, %v1166
        %v1168 = vlaneseq
        %v1169 = vshrl.u32 %v1168, 7
        %v1170 = vsub.s32 0, %v1169
        %v1171 = vrot.slane %v1151, %v1170
        %v1172 = vmul.f32 %v200, %v1159
        %v1173 = vmul.f32 %v200, %v1163
        %v1174 = vmul.f32 %v200, %v1167
        %v1175 = vmul.f32 %v200, %v1171
        %v1176 = vlaneseq
        %v1177 = vshrl.u32 %v1176, 7
        %v1178 = vsub.s32 1, %v1177
        %v1179 = vrot.slane %v1134, %v1178
        %v1180 = vlaneseq
        %v1181 = vshrl.u32 %v1180, 7
        %v1182 = vsub.s32 3, %v1181
        %v1183 = vrot.slane %v1134, %v1182
        %v1184 = vlaneseq
        %v1185 = vshrl.u32 %v1184, 7
        %v1186 = vsub.s32 5, %v1185
        %v1187 = vrot.slane %v1134, %v1186
        %v1188 = vlaneseq
        %v1189 = vshrl.u32 %v1188, 7
        %v1190 = vsub.s32 7, %v1189
        %v1191 = vrot.slane %v1134, %v1190
        %v1196 = vlaneseq
        %v1197 = vshrl.u32 %v1196, 7
        %v1198 = vsub.s32 1, %v1197
        %v1199 = vrot.slane %v1179, %v1198
        %v1200 = vlaneseq
        %v1201 = vshrl.u32 %v1200, 7
        %v1202 = vsub.s32 1, %v1201
        %v1203 = vrot.slane %v1183, %v1202
        %v1204 = vlaneseq
        %v1205 = vshrl.u32 %v1204, 7
        %v1206 = vsub.s32 1, %v1205
        %v1207 = vrot.slane %v1187, %v1206
        %v1208 = vlaneseq
        %v1209 = vshrl.u32 %v1208, 7
        %v1210 = vsub.s32 1, %v1209
        %v1211 = vrot.slane %v1191, %v1210
        %v1212 = vmul.f32 %v245, %v1199
        %v1213 = vmul.f32 %v245, %v1203
        %v1214 = vmul.f32 %v245, %v1207
        %v1215 = vmul.f32 %v245, %v1211
        %v1216 = vadd.f32 %v1172, %v1212
        %v1217 = vadd.f32 %v1173, %v1213
        %v1218 = vadd.f32 %v1174, %v1214
        %v1219 = vadd.f32 %v1175, %v1215
        %v1220 = vadd.f32 %v1216, %v294
        %v1221 = vadd.f32 %v1217, %v294
        %v1222 = vadd.f32 %v1218, %v294
        %v1223 = vadd.f32 %v1219, %v294
        %v1224 = vtanh.pop %v1220
        %v1225 = vtanh.pop %v1221
        %v1226 = vtanh.pop %v1222
        %v1227 = vtanh.pop %v1223
        %1228 = vmatprep.subr.mxu0 0.0
        %1229 = vmatpush1.msra.mxu0 0.0
        %1230 = vmatprep.subr.mxu0 0.0
        %1231 = vmatpush1.msra.mxu0 0.0
        %1232 = vmatprep.subr.mxu0 0.0
        %1233 = vmatpush1.msra.mxu0 0.0
        %1234 = vmatprep.subr.mxu0 0.0
        %1235 = vmatpush1.msra.mxu0 0.0
        %1236 = vmatprep.subr.mxu0 0.0
        %1237 = vmatpush1.msra.mxu0 0.0
        %1238 = vmatprep.subr.mxu0 0.0
        %1239 = vmatpush1.msra.mxu0 0.0
        %1240 = vmatprep.subr.mxu0 0.0
        %1241 = vmatpush1.msra.mxu0 0.0
        %1242 = vmatprep.subr.mxu0 0.0
        %1243 = vmatpush1.msra.mxu0 0.0
        %1244 = vmatprep.subr.mxu0 0.0
        %1245 = vmatpush1.msra.mxu0 0.0
        %1246 = vmatprep.subr.mxu0 0.0
        %1247 = vmatpush1.msra.mxu0 0.0
        %1248 = vmatprep.subr.mxu0 0.0
        %1249 = vmatpush1.msra.mxu0 0.0
        %1250 = vmatprep.subr.mxu0 0.0
        %1251 = vmatpush1.msra.mxu0 0.0
        %1252 = vmatprep.subr.mxu0 0.0
        %1253 = vmatpush1.msra.mxu0 0.0
        %1254 = vmatprep.subr.mxu0 0.0
        %1255 = vmatpush1.msra.mxu0 0.0
        %1256 = vmatprep.subr.mxu0 0.0
        %1257 = vmatpush1.msra.mxu0 0.0
        %1258 = vmatprep.subr.mxu0 %v1225
        %1259 = vmatpush1.msra.mxu0 %v1224
        %1260 = vmatprep.subr.mxu0 0.0
        %1261 = vmatpush2.msra.mxu0 0.0
        %1262 = vmatprep.subr.mxu0 0.0
        %1263 = vmatpush2.msra.mxu0 0.0
        %1264 = vmatprep.subr.mxu0 0.0
        %1265 = vmatpush2.msra.mxu0 0.0
        %1266 = vmatprep.subr.mxu0 0.0
        %1267 = vmatpush2.msra.mxu0 0.0
        %1268 = vmatprep.subr.mxu0 0.0
        %1269 = vmatpush2.msra.mxu0 0.0
        %1270 = vmatprep.subr.mxu0 0.0
        %1271 = vmatpush2.msra.mxu0 0.0
        %1272 = vmatprep.subr.mxu0 0.0
        %1273 = vmatpush2.msra.mxu0 0.0
        %1274 = vmatprep.subr.mxu0 0.0
        %1275 = vmatpush2.msra.mxu0 0.0
        %1276 = vmatprep.subr.mxu0 0.0
        %1277 = vmatpush2.msra.mxu0 0.0
        %1278 = vmatprep.subr.mxu0 0.0
        %1279 = vmatpush2.msra.mxu0 0.0
        %1280 = vmatprep.subr.mxu0 0.0
        %1281 = vmatpush2.msra.mxu0 0.0
        %1282 = vmatprep.subr.mxu0 0.0
        %1283 = vmatpush2.msra.mxu0 0.0
        %1284 = vmatprep.subr.mxu0 0.0
        %1285 = vmatpush2.msra.mxu0 0.0
        %1286 = vmatprep.subr.mxu0 0.0
        %1287 = vmatpush2.msra.mxu0 0.0
        %1288 = vmatprep.subr.mxu0 0.0
        %1289 = vmatpush2.msra.mxu0 0.0
        %1290 = vmatprep.subr.mxu0 0.0
        %1291 = vmatpush2.msra.mxu0 0.0
        %1292 = vmatprep.mubr.f32.mxu0 0.0
        %1293 = vmatmul.mubr.f32.gmra.mxu0 %v316
        %v1294 = vpop.f32.mrf.mxu0
        %v1295 = vadd.f32 %v307, %v1294
        %v1296 = vpop.f32.mrf.mxu0
        %v1297 = vadd.f32 %v307, %v1296
        %1298 = vmatprep.mubr.f32.mxu0 0.0
        %1299 = vmatmul.mubr.f32.gmra.mxu0 %v319
        %v1300 = vpop.f32.mrf.mxu0
        %v1301 = vadd.f32 %v312, %v1300
        %v1302 = vpop.f32.mrf.mxu0
        %v1303 = vadd.f32 %v312, %v1302
        %1304 = vdwg.mxu0
        %1305 = vmatprep.subr.mxu0 0.0
        %1306 = vmatpush1.msra.mxu0 0.0
        %1307 = vmatprep.subr.mxu0 0.0
        %1308 = vmatpush1.msra.mxu0 0.0
        %1309 = vmatprep.subr.mxu0 0.0
        %1310 = vmatpush1.msra.mxu0 0.0
        %1311 = vmatprep.subr.mxu0 0.0
        %1312 = vmatpush1.msra.mxu0 0.0
        %1313 = vmatprep.subr.mxu0 0.0
        %1314 = vmatpush1.msra.mxu0 0.0
        %1315 = vmatprep.subr.mxu0 0.0
        %1316 = vmatpush1.msra.mxu0 0.0
        %1317 = vmatprep.subr.mxu0 0.0
        %1318 = vmatpush1.msra.mxu0 0.0
        %1319 = vmatprep.subr.mxu0 0.0
        %1320 = vmatpush1.msra.mxu0 0.0
        %1321 = vmatprep.subr.mxu0 0.0
        %1322 = vmatpush1.msra.mxu0 0.0
        %1323 = vmatprep.subr.mxu0 0.0
        %1324 = vmatpush1.msra.mxu0 0.0
        %1325 = vmatprep.subr.mxu0 0.0
        %1326 = vmatpush1.msra.mxu0 0.0
        %1327 = vmatprep.subr.mxu0 0.0
        %1328 = vmatpush1.msra.mxu0 0.0
        %1329 = vmatprep.subr.mxu0 0.0
        %1330 = vmatpush1.msra.mxu0 0.0
        %1331 = vmatprep.subr.mxu0 0.0
        %1332 = vmatpush1.msra.mxu0 0.0
        %1333 = vmatprep.subr.mxu0 0.0
        %1334 = vmatpush1.msra.mxu0 0.0
        %1335 = vmatprep.subr.mxu0 %v1227
        %1336 = vmatpush1.msra.mxu0 %v1226
        %1337 = vmatprep.subr.mxu0 0.0
        %1338 = vmatpush2.msra.mxu0 0.0
        %1339 = vmatprep.subr.mxu0 0.0
        %1340 = vmatpush2.msra.mxu0 0.0
        %1341 = vmatprep.subr.mxu0 0.0
        %1342 = vmatpush2.msra.mxu0 0.0
        %1343 = vmatprep.subr.mxu0 0.0
        %1344 = vmatpush2.msra.mxu0 0.0
        %1345 = vmatprep.subr.mxu0 0.0
        %1346 = vmatpush2.msra.mxu0 0.0
        %1347 = vmatprep.subr.mxu0 0.0
        %1348 = vmatpush2.msra.mxu0 0.0
        %1349 = vmatprep.subr.mxu0 0.0
        %1350 = vmatpush2.msra.mxu0 0.0
        %1351 = vmatprep.subr.mxu0 0.0
        %1352 = vmatpush2.msra.mxu0 0.0
        %1353 = vmatprep.subr.mxu0 0.0
        %1354 = vmatpush2.msra.mxu0 0.0
        %1355 = vmatprep.subr.mxu0 0.0
        %1356 = vmatpush2.msra.mxu0 0.0
        %1357 = vmatprep.subr.mxu0 0.0
        %1358 = vmatpush2.msra.mxu0 0.0
        %1359 = vmatprep.subr.mxu0 0.0
        %1360 = vmatpush2.msra.mxu0 0.0
        %1361 = vmatprep.subr.mxu0 0.0
        %1362 = vmatpush2.msra.mxu0 0.0
        %1363 = vmatprep.subr.mxu0 0.0
        %1364 = vmatpush2.msra.mxu0 0.0
        %1365 = vmatprep.subr.mxu0 0.0
        %1366 = vmatpush2.msra.mxu0 0.0
        %1367 = vmatprep.subr.mxu0 0.0
        %1368 = vmatpush2.msra.mxu0 0.0
        %1369 = vmatprep.mubr.f32.mxu0 0.0
        %1370 = vmatmul.mubr.f32.gmra.mxu0 %v316
        %v1371 = vpop.f32.mrf.mxu0
        %v1372 = vadd.f32 %v307, %v1371
        %v1373 = vpop.f32.mrf.mxu0
        %v1374 = vadd.f32 %v307, %v1373
        %1375 = vmatprep.mubr.f32.mxu0 0.0
        %1376 = vmatmul.mubr.f32.gmra.mxu0 %v319
        %v1377 = vpop.f32.mrf.mxu0
        %v1378 = vadd.f32 %v312, %v1377
        %v1379 = vpop.f32.mrf.mxu0
        %v1380 = vadd.f32 %v312, %v1379
        %1381 = vdwg.mxu0
        %v1382 = vtanh.pop %v1295
        %v1383 = vtanh.pop %v1297
        %v1384 = vtanh.pop %v1372
        %v1385 = vtanh.pop %v1374
        %v1386 = vtanh.pop %v1301
        %v1387 = vtanh.pop %v1303
        %v1388 = vtanh.pop %v1378
        %v1389 = vtanh.pop %v1380
        %1390 = vmatprep.subr.mxu0 0.0
        %1391 = vmatpush1.msra.mxu0 0.0
        %1392 = vmatprep.subr.mxu0 0.0
        %1393 = vmatpush1.msra.mxu0 0.0
        %1394 = vmatprep.subr.mxu0 0.0
        %1395 = vmatpush1.msra.mxu0 0.0
        %1396 = vmatprep.subr.mxu0 0.0
        %1397 = vmatpush1.msra.mxu0 0.0
        %1398 = vmatprep.subr.mxu0 0.0
        %1399 = vmatpush1.msra.mxu0 0.0
        %1400 = vmatprep.subr.mxu0 0.0
        %1401 = vmatpush1.msra.mxu0 0.0
        %1402 = vmatprep.subr.mxu0 0.0
        %1403 = vmatpush1.msra.mxu0 0.0
        %1404 = vmatprep.subr.mxu0 0.0
        %1405 = vmatpush1.msra.mxu0 0.0
        %1406 = vmatprep.subr.mxu0 0.0
        %1407 = vmatpush1.msra.mxu0 0.0
        %1408 = vmatprep.subr.mxu0 0.0
        %1409 = vmatpush1.msra.mxu0 0.0
        %1410 = vmatprep.subr.mxu0 0.0
        %1411 = vmatpush1.msra.mxu0 0.0
        %1412 = vmatprep.subr.mxu0 0.0
        %1413 = vmatpush1.msra.mxu0 0.0
        %1414 = vmatprep.subr.mxu0 0.0
        %1415 = vmatpush1.msra.mxu0 0.0
        %1416 = vmatprep.subr.mxu0 0.0
        %1417 = vmatpush1.msra.mxu0 0.0
        %1418 = vmatprep.subr.mxu0 %v1387
        %1419 = vmatpush1.msra.mxu0 %v1386
        %1420 = vmatprep.subr.mxu0 %v1383
        %1421 = vmatpush1.msra.mxu0 %v1382
        %1422 = vmatprep.subr.mxu0 0.0
        %1423 = vmatpush2.msra.mxu0 0.0
        %1424 = vmatprep.subr.mxu0 0.0
        %1425 = vmatpush2.msra.mxu0 0.0
        %1426 = vmatprep.subr.mxu0 0.0
        %1427 = vmatpush2.msra.mxu0 0.0
        %1428 = vmatprep.subr.mxu0 0.0
        %1429 = vmatpush2.msra.mxu0 0.0
        %1430 = vmatprep.subr.mxu0 0.0
        %1431 = vmatpush2.msra.mxu0 0.0
        %1432 = vmatprep.subr.mxu0 0.0
        %1433 = vmatpush2.msra.mxu0 0.0
        %1434 = vmatprep.subr.mxu0 0.0
        %1435 = vmatpush2.msra.mxu0 0.0
        %1436 = vmatprep.subr.mxu0 0.0
        %1437 = vmatpush2.msra.mxu0 0.0
        %1438 = vmatprep.subr.mxu0 0.0
        %1439 = vmatpush2.msra.mxu0 0.0
        %1440 = vmatprep.subr.mxu0 0.0
        %1441 = vmatpush2.msra.mxu0 0.0
        %1442 = vmatprep.subr.mxu0 0.0
        %1443 = vmatpush2.msra.mxu0 0.0
        %1444 = vmatprep.subr.mxu0 0.0
        %1445 = vmatpush2.msra.mxu0 0.0
        %1446 = vmatprep.subr.mxu0 0.0
        %1447 = vmatpush2.msra.mxu0 0.0
        %1448 = vmatprep.subr.mxu0 0.0
        %1449 = vmatpush2.msra.mxu0 0.0
        %1450 = vmatprep.subr.mxu0 0.0
        %1451 = vmatpush2.msra.mxu0 0.0
        %1452 = vmatprep.subr.mxu0 0.0
        %1453 = vmatpush2.msra.mxu0 0.0
        %1454 = vmatprep.mubr.f32.mxu0 0.0
        %1455 = vmatmul.mubr.f32.gmra.mxu0 %v505
        %v1456 = vpop.f32.mrf.mxu0
        %v1457 = vadd.f32 %v486, %v1456
        %v1458 = vpop.f32.mrf.mxu0
        %v1459 = vadd.f32 %v486, %v1458
        %1460 = vmatprep.mubr.f32.mxu0 0.0
        %1461 = vmatmul.mubr.f32.gmra.mxu0 %v508
        %v1462 = vpop.f32.mrf.mxu0
        %v1463 = vadd.f32 %v491, %v1462
        %v1464 = vpop.f32.mrf.mxu0
        %v1465 = vadd.f32 %v491, %v1464
        %1466 = vmatprep.mubr.f32.mxu0 0.0
        %1467 = vmatmul.mubr.f32.gmra.mxu0 %v511
        %v1468 = vpop.f32.mrf.mxu0
        %v1469 = vadd.f32 %v496, %v1468
        %v1470 = vpop.f32.mrf.mxu0
        %v1471 = vadd.f32 %v496, %v1470
        %1472 = vmatprep.mubr.f32.mxu0 0.0
        %1473 = vmatmul.mubr.f32.gmra.mxu0 %v514
        %v1474 = vpop.f32.mrf.mxu0
        %v1475 = vadd.f32 %v501, %v1474
        %v1476 = vpop.f32.mrf.mxu0
        %v1477 = vadd.f32 %v501, %v1476
        %1478 = vdwg.mxu0
        %1479 = vmatprep.subr.mxu0 0.0
        %1480 = vmatpush1.msra.mxu0 0.0
        %1481 = vmatprep.subr.mxu0 0.0
        %1482 = vmatpush1.msra.mxu0 0.0
        %1483 = vmatprep.subr.mxu0 0.0
        %1484 = vmatpush1.msra.mxu0 0.0
        %1485 = vmatprep.subr.mxu0 0.0
        %1486 = vmatpush1.msra.mxu0 0.0
        %1487 = vmatprep.subr.mxu0 0.0
        %1488 = vmatpush1.msra.mxu0 0.0
        %1489 = vmatprep.subr.mxu0 0.0
        %1490 = vmatpush1.msra.mxu0 0.0
        %1491 = vmatprep.subr.mxu0 0.0
        %1492 = vmatpush1.msra.mxu0 0.0
        %1493 = vmatprep.subr.mxu0 0.0
        %1494 = vmatpush1.msra.mxu0 0.0
        %1495 = vmatprep.subr.mxu0 0.0
        %1496 = vmatpush1.msra.mxu0 0.0
        %1497 = vmatprep.subr.mxu0 0.0
        %1498 = vmatpush1.msra.mxu0 0.0
        %1499 = vmatprep.subr.mxu0 0.0
        %1500 = vmatpush1.msra.mxu0 0.0
        %1501 = vmatprep.subr.mxu0 0.0
        %1502 = vmatpush1.msra.mxu0 0.0
        %1503 = vmatprep.subr.mxu0 0.0
        %1504 = vmatpush1.msra.mxu0 0.0
        %1505 = vmatprep.subr.mxu0 0.0
        %1506 = vmatpush1.msra.mxu0 0.0
        %1507 = vmatprep.subr.mxu0 %v1389
        %1508 = vmatpush1.msra.mxu0 %v1388
        %1509 = vmatprep.subr.mxu0 %v1385
        %1510 = vmatpush1.msra.mxu0 %v1384
        %1511 = vmatprep.subr.mxu0 0.0
        %1512 = vmatpush2.msra.mxu0 0.0
        %1513 = vmatprep.subr.mxu0 0.0
        %1514 = vmatpush2.msra.mxu0 0.0
        %1515 = vmatprep.subr.mxu0 0.0
        %1516 = vmatpush2.msra.mxu0 0.0
        %1517 = vmatprep.subr.mxu0 0.0
        %1518 = vmatpush2.msra.mxu0 0.0
        %1519 = vmatprep.subr.mxu0 0.0
        %1520 = vmatpush2.msra.mxu0 0.0
        %1521 = vmatprep.subr.mxu0 0.0
        %1522 = vmatpush2.msra.mxu0 0.0
        %1523 = vmatprep.subr.mxu0 0.0
        %1524 = vmatpush2.msra.mxu0 0.0
        %1525 = vmatprep.subr.mxu0 0.0
        %1526 = vmatpush2.msra.mxu0 0.0
        %1527 = vmatprep.subr.mxu0 0.0
        %1528 = vmatpush2.msra.mxu0 0.0
        %1529 = vmatprep.subr.mxu0 0.0
        %1530 = vmatpush2.msra.mxu0 0.0
        %1531 = vmatprep.subr.mxu0 0.0
        %1532 = vmatpush2.msra.mxu0 0.0
        %1533 = vmatprep.subr.mxu0 0.0
        %1534 = vmatpush2.msra.mxu0 0.0
        %1535 = vmatprep.subr.mxu0 0.0
        %1536 = vmatpush2.msra.mxu0 0.0
        %1537 = vmatprep.subr.mxu0 0.0
        %1538 = vmatpush2.msra.mxu0 0.0
        %1539 = vmatprep.subr.mxu0 0.0
        %1540 = vmatpush2.msra.mxu0 0.0
        %1541 = vmatprep.subr.mxu0 0.0
        %1542 = vmatpush2.msra.mxu0 0.0
        %1543 = vmatprep.mubr.f32.mxu0 0.0
        %1544 = vmatmul.mubr.f32.gmra.mxu0 %v505
        %v1545 = vpop.f32.mrf.mxu0
        %v1546 = vadd.f32 %v486, %v1545
        %v1547 = vpop.f32.mrf.mxu0
        %v1548 = vadd.f32 %v486, %v1547
        %1549 = vmatprep.mubr.f32.mxu0 0.0
        %1550 = vmatmul.mubr.f32.gmra.mxu0 %v508
        %v1551 = vpop.f32.mrf.mxu0
        %v1552 = vadd.f32 %v491, %v1551
        %v1553 = vpop.f32.mrf.mxu0
        %v1554 = vadd.f32 %v491, %v1553
        %1555 = vmatprep.mubr.f32.mxu0 0.0
        %1556 = vmatmul.mubr.f32.gmra.mxu0 %v511
        %v1557 = vpop.f32.mrf.mxu0
        %v1558 = vadd.f32 %v496, %v1557
        %v1559 = vpop.f32.mrf.mxu0
        %v1560 = vadd.f32 %v496, %v1559
        %1561 = vmatprep.mubr.f32.mxu0 0.0
        %1562 = vmatmul.mubr.f32.gmra.mxu0 %v514
        %v1563 = vpop.f32.mrf.mxu0
        %v1564 = vadd.f32 %v501, %v1563
        %v1565 = vpop.f32.mrf.mxu0
        %v1566 = vadd.f32 %v501, %v1565
        %1567 = vdwg.mxu0
        %v1568 = vtanh.pop %v1457
        %v1569 = vtanh.pop %v1459
        %v1570 = vtanh.pop %v1546
        %v1571 = vtanh.pop %v1548
        %v1572 = vtanh.pop %v1463
        %v1573 = vtanh.pop %v1465
        %v1574 = vtanh.pop %v1552
        %v1575 = vtanh.pop %v1554
        %v1576 = vtanh.pop %v1469
        %v1577 = vtanh.pop %v1471
        %v1578 = vtanh.pop %v1558
        %v1579 = vtanh.pop %v1560
        %v1580 = vtanh.pop %v1475
        %v1581 = vtanh.pop %v1477
        %v1582 = vtanh.pop %v1564
        %v1583 = vtanh.pop %v1566
        %1584 = vmatprep.subr.mxu0 0.0
        %1585 = vmatpush1.msra.mxu0 0.0
        %1586 = vmatprep.subr.mxu0 0.0
        %1587 = vmatpush1.msra.mxu0 0.0
        %1588 = vmatprep.subr.mxu0 0.0
        %1589 = vmatpush1.msra.mxu0 0.0
        %1590 = vmatprep.subr.mxu0 0.0
        %1591 = vmatpush1.msra.mxu0 0.0
        %1592 = vmatprep.subr.mxu0 0.0
        %1593 = vmatpush1.msra.mxu0 0.0
        %1594 = vmatprep.subr.mxu0 0.0
        %1595 = vmatpush1.msra.mxu0 0.0
        %1596 = vmatprep.subr.mxu0 0.0
        %1597 = vmatpush1.msra.mxu0 0.0
        %1598 = vmatprep.subr.mxu0 0.0
        %1599 = vmatpush1.msra.mxu0 0.0
        %1600 = vmatprep.subr.mxu0 0.0
        %1601 = vmatpush1.msra.mxu0 0.0
        %1602 = vmatprep.subr.mxu0 0.0
        %1603 = vmatpush1.msra.mxu0 0.0
        %1604 = vmatprep.subr.mxu0 0.0
        %1605 = vmatpush1.msra.mxu0 0.0
        %1606 = vmatprep.subr.mxu0 0.0
        %1607 = vmatpush1.msra.mxu0 0.0
        %1608 = vmatprep.subr.mxu0 %v1581
        %1609 = vmatpush1.msra.mxu0 %v1580
        %1610 = vmatprep.subr.mxu0 %v1577
        %1611 = vmatpush1.msra.mxu0 %v1576
        %1612 = vmatprep.subr.mxu0 %v1573
        %1613 = vmatpush1.msra.mxu0 %v1572
        %1614 = vmatprep.subr.mxu0 %v1569
        %1615 = vmatpush1.msra.mxu0 %v1568
        %1616 = vmatprep.subr.mxu0 0.0
        %1617 = vmatpush2.msra.mxu0 0.0
        %1618 = vmatprep.subr.mxu0 0.0
        %1619 = vmatpush2.msra.mxu0 0.0
        %1620 = vmatprep.subr.mxu0 0.0
        %1621 = vmatpush2.msra.mxu0 0.0
        %1622 = vmatprep.subr.mxu0 0.0
        %1623 = vmatpush2.msra.mxu0 0.0
        %1624 = vmatprep.subr.mxu0 0.0
        %1625 = vmatpush2.msra.mxu0 0.0
        %1626 = vmatprep.subr.mxu0 0.0
        %1627 = vmatpush2.msra.mxu0 0.0
        %1628 = vmatprep.subr.mxu0 0.0
        %1629 = vmatpush2.msra.mxu0 0.0
        %1630 = vmatprep.subr.mxu0 0.0
        %1631 = vmatpush2.msra.mxu0 0.0
        %1632 = vmatprep.subr.mxu0 0.0
        %1633 = vmatpush2.msra.mxu0 0.0
        %1634 = vmatprep.subr.mxu0 0.0
        %1635 = vmatpush2.msra.mxu0 0.0
        %1636 = vmatprep.subr.mxu0 0.0
        %1637 = vmatpush2.msra.mxu0 0.0
        %1638 = vmatprep.subr.mxu0 0.0
        %1639 = vmatpush2.msra.mxu0 0.0
        %1640 = vmatprep.subr.mxu0 0.0
        %1641 = vmatpush2.msra.mxu0 0.0
        %1642 = vmatprep.subr.mxu0 0.0
        %1643 = vmatpush2.msra.mxu0 0.0
        %1644 = vmatprep.subr.mxu0 0.0
        %1645 = vmatpush2.msra.mxu0 0.0
        %1646 = vmatprep.subr.mxu0 0.0
        %1647 = vmatpush2.msra.mxu0 0.0
        %1648 = vmatprep.mubr.f32.mxu0 0.0
        %1649 = vmatmul.mubr.f32.gmra.mxu0 %v732
        %v1650 = vpop.f32.mrf.mxu0
        %v1651 = vadd.f32 %v713, %v1650
        %v1652 = vpop.f32.mrf.mxu0
        %v1653 = vadd.f32 %v713, %v1652
        %1654 = vmatprep.mubr.f32.mxu0 0.0
        %1655 = vmatmul.mubr.f32.gmra.mxu0 %v735
        %v1656 = vpop.f32.mrf.mxu0
        %v1657 = vadd.f32 %v718, %v1656
        %v1658 = vpop.f32.mrf.mxu0
        %v1659 = vadd.f32 %v718, %v1658
        %1660 = vmatprep.mubr.f32.mxu0 0.0
        %1661 = vmatmul.mubr.f32.gmra.mxu0 %v738
        %v1662 = vpop.f32.mrf.mxu0
        %v1663 = vadd.f32 %v723, %v1662
        %v1664 = vpop.f32.mrf.mxu0
        %v1665 = vadd.f32 %v723, %v1664
        %1666 = vmatprep.mubr.f32.mxu0 0.0
        %1667 = vmatmul.mubr.f32.gmra.mxu0 %v741
        %v1668 = vpop.f32.mrf.mxu0
        %v1669 = vadd.f32 %v728, %v1668
        %v1670 = vpop.f32.mrf.mxu0
        %v1671 = vadd.f32 %v728, %v1670
        %1672 = vdwg.mxu0
        %1673 = vmatprep.subr.mxu0 0.0
        %1674 = vmatpush1.msra.mxu0 0.0
        %1675 = vmatprep.subr.mxu0 0.0
        %1676 = vmatpush1.msra.mxu0 0.0
        %1677 = vmatprep.subr.mxu0 0.0
        %1678 = vmatpush1.msra.mxu0 0.0
        %1679 = vmatprep.subr.mxu0 0.0
        %1680 = vmatpush1.msra.mxu0 0.0
        %1681 = vmatprep.subr.mxu0 0.0
        %1682 = vmatpush1.msra.mxu0 0.0
        %1683 = vmatprep.subr.mxu0 0.0
        %1684 = vmatpush1.msra.mxu0 0.0
        %1685 = vmatprep.subr.mxu0 0.0
        %1686 = vmatpush1.msra.mxu0 0.0
        %1687 = vmatprep.subr.mxu0 0.0
        %1688 = vmatpush1.msra.mxu0 0.0
        %1689 = vmatprep.subr.mxu0 0.0
        %1690 = vmatpush1.msra.mxu0 0.0
        %1691 = vmatprep.subr.mxu0 0.0
        %1692 = vmatpush1.msra.mxu0 0.0
        %1693 = vmatprep.subr.mxu0 0.0
        %1694 = vmatpush1.msra.mxu0 0.0
        %1695 = vmatprep.subr.mxu0 0.0
        %1696 = vmatpush1.msra.mxu0 0.0
        %1697 = vmatprep.subr.mxu0 %v1583
        %1698 = vmatpush1.msra.mxu0 %v1582
        %1699 = vmatprep.subr.mxu0 %v1579
        %1700 = vmatpush1.msra.mxu0 %v1578
        %1701 = vmatprep.subr.mxu0 %v1575
        %1702 = vmatpush1.msra.mxu0 %v1574
        %1703 = vmatprep.subr.mxu0 %v1571
        %1704 = vmatpush1.msra.mxu0 %v1570
        %1705 = vmatprep.subr.mxu0 0.0
        %1706 = vmatpush2.msra.mxu0 0.0
        %1707 = vmatprep.subr.mxu0 0.0
        %1708 = vmatpush2.msra.mxu0 0.0
        %1709 = vmatprep.subr.mxu0 0.0
        %1710 = vmatpush2.msra.mxu0 0.0
        %1711 = vmatprep.subr.mxu0 0.0
        %1712 = vmatpush2.msra.mxu0 0.0
        %1713 = vmatprep.subr.mxu0 0.0
        %1714 = vmatpush2.msra.mxu0 0.0
        %1715 = vmatprep.subr.mxu0 0.0
        %1716 = vmatpush2.msra.mxu0 0.0
        %1717 = vmatprep.subr.mxu0 0.0
        %1718 = vmatpush2.msra.mxu0 0.0
        %1719 = vmatprep.subr.mxu0 0.0
        %1720 = vmatpush2.msra.mxu0 0.0
        %1721 = vmatprep.subr.mxu0 0.0
        %1722 = vmatpush2.msra.mxu0 0.0
        %1723 = vmatprep.subr.mxu0 0.0
        %1724 = vmatpush2.msra.mxu0 0.0
        %1725 = vmatprep.subr.mxu0 0.0
        %1726 = vmatpush2.msra.mxu0 0.0
        %1727 = vmatprep.subr.mxu0 0.0
        %1728 = vmatpush2.msra.mxu0 0.0
        %1729 = vmatprep.subr.mxu0 0.0
        %1730 = vmatpush2.msra.mxu0 0.0
        %1731 = vmatprep.subr.mxu0 0.0
        %1732 = vmatpush2.msra.mxu0 0.0
        %1733 = vmatprep.subr.mxu0 0.0
        %1734 = vmatpush2.msra.mxu0 0.0
        %1735 = vmatprep.subr.mxu0 0.0
        %1736 = vmatpush2.msra.mxu0 0.0
        %1737 = vmatprep.mubr.f32.mxu0 0.0
        %1738 = vmatmul.mubr.f32.gmra.mxu0 %v732
        %v1739 = vpop.f32.mrf.mxu0
        %v1740 = vadd.f32 %v713, %v1739
        %v1741 = vpop.f32.mrf.mxu0
        %v1742 = vadd.f32 %v713, %v1741
        %1743 = vmatprep.mubr.f32.mxu0 0.0
        %1744 = vmatmul.mubr.f32.gmra.mxu0 %v735
        %v1745 = vpop.f32.mrf.mxu0
        %v1746 = vadd.f32 %v718, %v1745
        %v1747 = vpop.f32.mrf.mxu0
        %v1748 = vadd.f32 %v718, %v1747
        %1749 = vmatprep.mubr.f32.mxu0 0.0
        %1750 = vmatmul.mubr.f32.gmra.mxu0 %v738
        %v1751 = vpop.f32.mrf.mxu0
        %v1752 = vadd.f32 %v723, %v1751
        %v1753 = vpop.f32.mrf.mxu0
        %v1754 = vadd.f32 %v723, %v1753
        %1755 = vmatprep.mubr.f32.mxu0 0.0
        %1756 = vmatmul.mubr.f32.gmra.mxu0 %v741
        %v1757 = vpop.f32.mrf.mxu0
        %v1758 = vadd.f32 %v728, %v1757
        %v1759 = vpop.f32.mrf.mxu0
        %v1760 = vadd.f32 %v728, %v1759
        %1761 = vdwg.mxu0
        %v1762 = vtanh.pop %v1651
        %v1763 = vtanh.pop %v1653
        %v1764 = vtanh.pop %v1740
        %v1765 = vtanh.pop %v1742
        %v1766 = vtanh.pop %v1657
        %v1767 = vtanh.pop %v1659
        %v1768 = vtanh.pop %v1746
        %v1769 = vtanh.pop %v1748
        %v1770 = vtanh.pop %v1663
        %v1771 = vtanh.pop %v1665
        %v1772 = vtanh.pop %v1752
        %v1773 = vtanh.pop %v1754
        %v1774 = vtanh.pop %v1669
        %v1775 = vtanh.pop %v1671
        %v1776 = vtanh.pop %v1758
        %v1777 = vtanh.pop %v1760
        %1778 = vmatprep.subr.mxu0 0.0
        %1779 = vmatpush1.msra.mxu0 0.0
        %1780 = vmatprep.subr.mxu0 0.0
        %1781 = vmatpush1.msra.mxu0 0.0
        %1782 = vmatprep.subr.mxu0 0.0
        %1783 = vmatpush1.msra.mxu0 0.0
        %1784 = vmatprep.subr.mxu0 0.0
        %1785 = vmatpush1.msra.mxu0 0.0
        %1786 = vmatprep.subr.mxu0 0.0
        %1787 = vmatpush1.msra.mxu0 0.0
        %1788 = vmatprep.subr.mxu0 0.0
        %1789 = vmatpush1.msra.mxu0 0.0
        %1790 = vmatprep.subr.mxu0 0.0
        %1791 = vmatpush1.msra.mxu0 0.0
        %1792 = vmatprep.subr.mxu0 0.0
        %1793 = vmatpush1.msra.mxu0 0.0
        %1794 = vmatprep.subr.mxu0 0.0
        %1795 = vmatpush1.msra.mxu0 0.0
        %1796 = vmatprep.subr.mxu0 0.0
        %1797 = vmatpush1.msra.mxu0 0.0
        %1798 = vmatprep.subr.mxu0 0.0
        %1799 = vmatpush1.msra.mxu0 0.0
        %1800 = vmatprep.subr.mxu0 0.0
        %1801 = vmatpush1.msra.mxu0 0.0
        %1802 = vmatprep.subr.mxu0 %v1775
        %1803 = vmatpush1.msra.mxu0 %v1774
        %1804 = vmatprep.subr.mxu0 %v1771
        %1805 = vmatpush1.msra.mxu0 %v1770
        %1806 = vmatprep.subr.mxu0 %v1767
        %1807 = vmatpush1.msra.mxu0 %v1766
        %1808 = vmatprep.subr.mxu0 %v1763
        %1809 = vmatpush1.msra.mxu0 %v1762
        %1810 = vmatprep.subr.mxu0 0.0
        %1811 = vmatpush2.msra.mxu0 0.0
        %1812 = vmatprep.subr.mxu0 0.0
        %1813 = vmatpush2.msra.mxu0 0.0
        %1814 = vmatprep.subr.mxu0 0.0
        %1815 = vmatpush2.msra.mxu0 0.0
        %1816 = vmatprep.subr.mxu0 0.0
        %1817 = vmatpush2.msra.mxu0 0.0
        %1818 = vmatprep.subr.mxu0 0.0
        %1819 = vmatpush2.msra.mxu0 0.0
        %1820 = vmatprep.subr.mxu0 0.0
        %1821 = vmatpush2.msra.mxu0 0.0
        %1822 = vmatprep.subr.mxu0 0.0
        %1823 = vmatpush2.msra.mxu0 0.0
        %1824 = vmatprep.subr.mxu0 0.0
        %1825 = vmatpush2.msra.mxu0 0.0
        %1826 = vmatprep.subr.mxu0 0.0
        %1827 = vmatpush2.msra.mxu0 0.0
        %1828 = vmatprep.subr.mxu0 0.0
        %1829 = vmatpush2.msra.mxu0 0.0
        %1830 = vmatprep.subr.mxu0 0.0
        %1831 = vmatpush2.msra.mxu0 0.0
        %1832 = vmatprep.subr.mxu0 0.0
        %1833 = vmatpush2.msra.mxu0 0.0
        %1834 = vmatprep.subr.mxu0 0.0
        %1835 = vmatpush2.msra.mxu0 0.0
        %1836 = vmatprep.subr.mxu0 0.0
        %1837 = vmatpush2.msra.mxu0 0.0
        %1838 = vmatprep.subr.mxu0 0.0
        %1839 = vmatpush2.msra.mxu0 0.0
        %1840 = vmatprep.subr.mxu0 0.0
        %1841 = vmatpush2.msra.mxu0 0.0
        %1842 = vmatprep.mubr.f32.mxu0 0.0
        %1843 = vmatmul.mubr.f32.gmra.mxu0 %v943
        %v1844 = vpop.f32.mrf.mxu0
        %v1845 = vadd.f32 %v940, %v1844
        %v1846 = vpop.f32.mrf.mxu0
        %v1847 = vadd.f32 %v940, %v1846
        %1848 = vdwg.mxu0
        %1849 = vmatprep.subr.mxu0 0.0
        %1850 = vmatpush1.msra.mxu0 0.0
        %1851 = vmatprep.subr.mxu0 0.0
        %1852 = vmatpush1.msra.mxu0 0.0
        %1853 = vmatprep.subr.mxu0 0.0
        %1854 = vmatpush1.msra.mxu0 0.0
        %1855 = vmatprep.subr.mxu0 0.0
        %1856 = vmatpush1.msra.mxu0 0.0
        %1857 = vmatprep.subr.mxu0 0.0
        %1858 = vmatpush1.msra.mxu0 0.0
        %1859 = vmatprep.subr.mxu0 0.0
        %1860 = vmatpush1.msra.mxu0 0.0
        %1861 = vmatprep.subr.mxu0 0.0
        %1862 = vmatpush1.msra.mxu0 0.0
        %1863 = vmatprep.subr.mxu0 0.0
        %1864 = vmatpush1.msra.mxu0 0.0
        %1865 = vmatprep.subr.mxu0 0.0
        %1866 = vmatpush1.msra.mxu0 0.0
        %1867 = vmatprep.subr.mxu0 0.0
        %1868 = vmatpush1.msra.mxu0 0.0
        %1869 = vmatprep.subr.mxu0 0.0
        %1870 = vmatpush1.msra.mxu0 0.0
        %1871 = vmatprep.subr.mxu0 0.0
        %1872 = vmatpush1.msra.mxu0 0.0
        %1873 = vmatprep.subr.mxu0 %v1777
        %1874 = vmatpush1.msra.mxu0 %v1776
        %1875 = vmatprep.subr.mxu0 %v1773
        %1876 = vmatpush1.msra.mxu0 %v1772
        %1877 = vmatprep.subr.mxu0 %v1769
        %1878 = vmatpush1.msra.mxu0 %v1768
        %1879 = vmatprep.subr.mxu0 %v1765
        %1880 = vmatpush1.msra.mxu0 %v1764
        %1881 = vmatprep.subr.mxu0 0.0
        %1882 = vmatpush2.msra.mxu0 0.0
        %1883 = vmatprep.subr.mxu0 0.0
        %1884 = vmatpush2.msra.mxu0 0.0
        %1885 = vmatprep.subr.mxu0 0.0
        %1886 = vmatpush2.msra.mxu0 0.0
        %1887 = vmatprep.subr.mxu0 0.0
        %1888 = vmatpush2.msra.mxu0 0.0
        %1889 = vmatprep.subr.mxu0 0.0
        %1890 = vmatpush2.msra.mxu0 0.0
        %1891 = vmatprep.subr.mxu0 0.0
        %1892 = vmatpush2.msra.mxu0 0.0
        %1893 = vmatprep.subr.mxu0 0.0
        %1894 = vmatpush2.msra.mxu0 0.0
        %1895 = vmatprep.subr.mxu0 0.0
        %1896 = vmatpush2.msra.mxu0 0.0
        %1897 = vmatprep.subr.mxu0 0.0
        %1898 = vmatpush2.msra.mxu0 0.0
        %1899 = vmatprep.subr.mxu0 0.0
        %1900 = vmatpush2.msra.mxu0 0.0
        %1901 = vmatprep.subr.mxu0 0.0
        %1902 = vmatpush2.msra.mxu0 0.0
        %1903 = vmatprep.subr.mxu0 0.0
        %1904 = vmatpush2.msra.mxu0 0.0
        %1905 = vmatprep.subr.mxu0 0.0
        %1906 = vmatpush2.msra.mxu0 0.0
        %1907 = vmatprep.subr.mxu0 0.0
        %1908 = vmatpush2.msra.mxu0 0.0
        %1909 = vmatprep.subr.mxu0 0.0
        %1910 = vmatpush2.msra.mxu0 0.0
        %1911 = vmatprep.subr.mxu0 0.0
        %1912 = vmatpush2.msra.mxu0 0.0
        %1913 = vmatprep.mubr.f32.mxu0 0.0
        %1914 = vmatmul.mubr.f32.gmra.mxu0 %v943
        %v1915 = vpop.f32.mrf.mxu0
        %v1916 = vadd.f32 %v940, %v1915
        %v1917 = vpop.f32.mrf.mxu0
        %v1918 = vadd.f32 %v940, %v1917
        %1919 = vdwg.mxu0
        %v1920 = vtanh.pop %v1845
        %v1921 = vtanh.pop %v1847
        %v1922 = vtanh.pop %v1916
        %v1923 = vtanh.pop %v1918
        %v1924 = vmul.f32 %v1920, 0.5
        %v1925 = vmul.f32 %v1921, 0.5
        %v1926 = vmul.f32 %v1922, 0.5
        %v1927 = vmul.f32 %v1923, 0.5
        %v1928 = vadd.f32 %v1924, 0.5
        %v1929 = vadd.f32 %v1925, 0.5
        %v1930 = vadd.f32 %v1926, 0.5
        %v1931 = vadd.f32 %v1927, 0.5
        %v1936 = vcombine.low %v1928, %v1929
        %v1937 = vcombine.low %v1930, %v1931
        %v1939 = vunpack.c.l.s4 1966171168
        %v1940 = vunpack.c.0.s8 %v1939
        %v1941 = vlaneseq
        %v1942 = vshrl.u32 %v1941, 7
        %v1943 = vsub.s32 %v1940, %v1942
        %v1944 = vrot.slane %v1936, %v1943
        %v1946 = vunpack.c.l.s4 1966171168
        %v1947 = vunpack.c.0.s8 %v1946
        %v1948 = vlaneseq
        %v1949 = vshrl.u32 %v1948, 7
        %v1950 = vsub.s32 %v1947, %v1949
        %v1951 = vrot.slane %v1937, %v1950
        %v1952 = vcombine.low %v1944, %v1951
        %v1954 = vunpack.c.l.s4 1966171168
        %v1955 = vunpack.c.0.s8 %v1954
        %v1956 = vlaneseq
        %v1957 = vshrl.u32 %v1956, 7
        %v1958 = vsub.s32 %v1955, %v1957
        %v1959 = vrot.slane %v1952, %v1958
        %s1961 = scalar_lea.vmem %s164, 4 [#allocation2]
        %1962 = vst.msk [vmem:[%s1961] sm:$0xf] %vm1131, %v1959
        %s1963 = sand.u32 %s93, 1
        %s1964 = scalar_lea.sflag [#allocation3], %s1963
        %s1965 = sand.u32 %s93, 1
        %s1966 = smul.addr %s1965, 8
        %s1967 = scalar_lea.vmem [#allocation2], %s1966
        // Predicated region
        $region33: #{tpu_custom_call.1} parent=31 // pred_check
          %p1968 = pneg %p103
        $region34: #{tpu_custom_call.1} parent=31 // pred_check_branch
          %1970 = sbr.rel (%p1968) target = $region36
        $region35: #{tpu_custom_call.1} parent=31 // pred_region
          %s1971 = smul.u32 8, %s17
          %s1973 = ssub.s32 128, 128
          %1974 = vsyncadd %s1964, %s1973
          %s1975 = smul.addr %s1971, 16
          %s1976 = scalar_lea.hbm %s3, %s1975
          %s1978 = sshll.u32 %s1967, 4
          %s1979 = int_to_ptr.vmem [resolvable:$true] %s1978
          %1981 = dma.vmem_to_hbm [thread:$0]  %s1979, 128, %s1976, %s1964
        $region36: #{tpu_custom_call.1} parent=31 // pred_fallthru
          _
      $region32: #{tpu_custom_call.1} parent=5 // pred_fallthru
        _
      %p1982 = scmp.le.s32.totalorder 2, %s12
      // Predicated region
      $region37: #{tpu_custom_call.1} parent=5 // pred_check
        %p1983 = pneg %p1982
      $region38: #{tpu_custom_call.1} parent=5 // pred_check_branch
        %1985 = sbr.rel (%p1983) target = $region40
      $region39: #{tpu_custom_call.1} parent=5 // pred_region
        %s1986 = ssub.s32 %s12, 2
        // Predicated region
        $region41: #{tpu_custom_call.1} parent=39 // pred_check
          %p1987 = pneg %p109
        $region42: #{tpu_custom_call.1} parent=39 // pred_check_branch
          %1989 = sbr.rel (%p1987) target = $region44
        $region43: #{tpu_custom_call.1} parent=39 // pred_region
          %s1990 = sand.u32 %s94, 1
          %s1991 = scalar_lea.sflag [#allocation3], %s1990
          %s1992 = sand.u32 %s94, 1
          %s1993 = smul.addr %s1992, 8
          %s1994 = scalar_lea.vmem [#allocation2], %s1993
          %1995 = dma.done %s1991, 128
        $region44: #{tpu_custom_call.1} parent=39 // pred_fallthru
          _
      $region40: #{tpu_custom_call.1} parent=5 // pred_fallthru
        _
    $region6: #{tpu_custom_call.1} parent=1 // loop_footer
      %s16 = sadd.s32 1, %s12
    $region7: #{tpu_custom_call.1} parent=1 // loop_footer_branch
      %11 = sbr.rel target = $region3
    $region8: #{tpu_custom_call.1} parent=1 // loop_exit
      _
    %1996 = vsyncpa [#allocation3], 1
    %s1997 = scalar_lea.sflag [#allocation3], 1
    %1998 = vsyncpa %s1997, 1

</llo_original>
